<compile_context>
chip_gen: v7x
topology: tpu7x:2x2x1
jax: 0.10.0
libtpu: 0.0.40
codegen_flags: <defaults>
</compile_context>

<pallas_src>
import jax
import jax.numpy as jnp
import numpy as np
from jax.experimental import pallas as pl
from jax.experimental.pallas import tpu as pltpu


def coattention_kernel(ux_ref, ix_ref, um_ref, im_ref,
                       wtg_ref, wp_ref, wb_ref,
                       uout_ref, iout_ref, uw_ref, iw_ref):
    # Per grid step (TB = batch tile):
    #   ux_ref : (TB, UR, F)   user review inputs
    #   ix_ref : (TB, IR, F)   item review inputs
    #   um_ref : (TB, 1, UR)   user mask (1.0 valid / 0.0 pad), lane-dense
    #   im_ref : (TB, 1, IR)   item mask
    #   wtg_ref: (F, 2H)       fused [W_trans^T | W_gate^T]
    #   wp_ref : (TB, 1, H)    proj weight row, pre-broadcast over TB
    #   wb_ref : (F, F)        bilinear weight
    #   uout_ref/iout_ref: (TB, 1, F); uw_ref: (TB, 1, UR); iw_ref: (TB, 1, IR)
    neg_big = jnp.float32(-100000000.0)

    ux3 = ux_ref[...]                     # (TB, UR, F), native dtype (no forced upcast)
    ix3 = ix_ref[...]                     # (TB, IR, F)
    TB, IR, F = ix3.shape
    UR = ux3.shape[1]
    H = wtg_ref.shape[1] // 2

    # ---------------- item aggregator (GatedAttention) ----------------
    # One big flattened matmul for the fused trans|gate projection.
    xi2 = ix3.reshape(TB * IR, F)
    tg = jnp.dot(xi2, wtg_ref[...], preferred_element_type=jnp.float32)   # (TB*IR, 2H)
    e = jnp.tanh(tg[:, :H]) * jax.nn.sigmoid(tg[:, H:])                   # (TB*IR, H)
    e3 = e.reshape(TB, IR, H)

    # Scores directly in lane-dense (TB, 1, IR) layout: per batch [1,H] @ [H,IR].
    s_item = jnp.einsum('bqh,bkh->bqk', wp_ref[...], e3,
                        preferred_element_type=jnp.float32)               # (TB, 1, IR)
    s_item = jnp.where(im_ref[...] > 0.0, s_item, neg_big)
    s_item = s_item - jnp.max(s_item, axis=-1, keepdims=True)
    p_item = jnp.exp(s_item)
    w_item = p_item / jnp.sum(p_item, axis=-1, keepdims=True)             # (TB, 1, IR)
    iw_ref[...] = w_item.astype(iw_ref.dtype)                             # lane-dense store

    # Weighted pooling on the MXU: [1,IR] @ [IR,F] per batch.
    iout = jnp.einsum('bqk,bkd->bqd', w_item, ix3,
                      preferred_element_type=jnp.float32)                 # (TB, 1, F)
    iout_ref[...] = iout.astype(iout_ref.dtype)

    # ---------------- user side: bilinear co-attention ----------------
    ux2 = ux3.reshape(TB * UR, F)
    uwx = jnp.dot(ux2, wb_ref[...], preferred_element_type=jnp.float32)   # (TB*UR, F)
    uwx3 = uwx.reshape(TB, UR, F)

    # sim^T[b, i, u] = sum_d item_x[b,i,d] * (user_x @ Wb)[b,u,d]  -> (TB, IR, UR)
    simT = jnp.einsum('bqd,bkd->bqk', ix3, uwx3,
                      preferred_element_type=jnp.float32)
    # max over the item axis == torch.max(sim, dim=2); result stays lane-dense over UR.
    s_user = jnp.max(simT, axis=1, keepdims=True)                         # (TB, 1, UR)
    # TODO(synk): masked_softmax / attention_weighted_sum are not defined in the provided
    # source; implemented as masked_fill(-1e8)+softmax and sum(w * x, dim=1), matching
    # the GatedAttention convention in the same file.
    s_user = jnp.where(um_ref[...] > 0.0, s_user, neg_big)
    s_user = s_user - jnp.max(s_user, axis=-1, keepdims=True)
    p_user = jnp.exp(s_user)
    w_user = p_user / jnp.sum(p_user, axis=-1, keepdims=True)             # (TB, 1, UR)
    uw_ref[...] = w_user.astype(uw_ref.dtype)

    uout = jnp.einsum('bqk,bkd->bqd', w_user, ux3,
                      preferred_element_type=jnp.float32)                 # (TB, 1, F)
    uout_ref[...] = uout.astype(uout_ref.dtype)


def unbalanced_coattention(user_x, item_x, user_masks, item_masks,
                           w_trans, w_gate, w_proj, w_bilinear, block_b=None):
    """
    user_x:      [B, UR, F] float
    item_x:      [B, IR, F] float
    user_masks:  [B, UR] bool
    item_masks:  [B, IR] bool
    w_trans:     [H, F]  (torch Linear weight layout)
    w_gate:      [H, F]
    w_proj:      [1, H]
    w_bilinear:  [F, F]  (the torch module requires in_features == out_features here)

    Returns: user_outputs [B,F], item_outputs [B,F],
             user_review_weights [B,UR], item_review_weights [B,IR]
    """
    B, UR, F = user_x.shape
    _, IR, _ = item_x.shape
    H = w_trans.shape[0]
    assert w_bilinear.shape == (F, F), "bilinear weight must match review feature dim"

    # Batch tile: amortize per-step pipeline overhead / fill the MXU, but keep >= 2
    # grid steps so v7x's two TensorCores both stream.
    if block_b is None:
        block_b = 1
        for cand in (32, 16, 8, 4, 2, 1):
            if B % cand == 0 and B // cand >= 2:
                block_b = cand
                break
    assert B % block_b == 0, "batch must be divisible by block_b"
    grid_b = B // block_b

    # Glue: fuse trans|gate weights into (F, 2H); proj weight as a pre-broadcast row
    # block; masks lane-dense as (B, 1, S) f32.
    w_tg = jnp.concatenate([jnp.asarray(w_trans).T, jnp.asarray(w_gate).T], axis=1)
    wp_b = jnp.broadcast_to(jnp.reshape(w_proj, (1, 1, H)), (block_b, 1, H))
    um = user_masks.astype(jnp.float32).reshape(B, 1, UR)
    im = item_masks.astype(jnp.float32).reshape(B, 1, IR)

    uout, iout, uw, iw = pl.pallas_call(
        coattention_kernel,
        out_shape=(
            jax.ShapeDtypeStruct((B, 1, F), jnp.float32),   # user_outputs
            jax.ShapeDtypeStruct((B, 1, F), jnp.float32),   # item_outputs
            jax.ShapeDtypeStruct((B, 1, UR), jnp.float32),  # user_review_weights
            jax.ShapeDtypeStruct((B, 1, IR), jnp.float32),  # item_review_weights
        ),
        grid_spec=pltpu.PrefetchScalarGridSpec(
            num_scalar_prefetch=0,
            grid=(grid_b,),
            in_specs=[
                pl.BlockSpec((block_b, UR, F), lambda b: (b, 0, 0)),   # user_x
                pl.BlockSpec((block_b, IR, F), lambda b: (b, 0, 0)),   # item_x
                pl.BlockSpec((block_b, 1, UR), lambda b: (b, 0, 0)),   # user mask
                pl.BlockSpec((block_b, 1, IR), lambda b: (b, 0, 0)),   # item mask
                pl.BlockSpec((F, 2 * H), lambda b: (0, 0)),            # fused trans|gate
                pl.BlockSpec((block_b, 1, H), lambda b: (0, 0, 0)),    # proj row
                pl.BlockSpec((F, F), lambda b: (0, 0)),                # bilinear weight
            ],
            out_specs=(
                pl.BlockSpec((block_b, 1, F), lambda b: (b, 0, 0)),
                pl.BlockSpec((block_b, 1, F), lambda b: (b, 0, 0)),
                pl.BlockSpec((block_b, 1, UR), lambda b: (b, 0, 0)),
                pl.BlockSpec((block_b, 1, IR), lambda b: (b, 0, 0)),
            ),
        ),
        compiler_params=pltpu.CompilerParams(
            dimension_semantics=("parallel",),
            vmem_limit_bytes=48 * 1024 * 1024,
        ),
    )(user_x, item_x, um, im, w_tg, wp_b, jnp.asarray(w_bilinear))

    return uout[:, 0, :], iout[:, 0, :], uw[:, 0, :], iw[:, 0, :]


def unbalanced_coattention_reference(user_x, item_x, user_masks, item_masks,
                                     w_trans, w_gate, w_proj, w_bilinear):
    """Pure-JAX reference mirroring the PyTorch forward."""
    neg_big = -100000000.0
    # item aggregator (GatedAttention)
    t = jnp.tanh(item_x @ w_trans.T)
    g = jax.nn.sigmoid(item_x @ w_gate.T)
    s = ((t * g) @ w_proj.T)[..., 0]                       # (B, IR)
    s = jnp.where(item_masks, s, neg_big)
    iw = jax.nn.softmax(s, axis=-1)
    item_out = jnp.sum(iw[..., None] * item_x, axis=1)
    # bilinear + max over items + masked softmax + weighted sum
    sim = jnp.einsum('bud,bid->bui', user_x @ w_bilinear, item_x)
    us = jnp.max(sim, axis=2)
    us = jnp.where(user_masks, us, neg_big)
    uw = jax.nn.softmax(us, axis=-1)
    user_out = jnp.sum(uw[..., None] * user_x, axis=1)
    return user_out, item_out, uw, iw


if __name__ == "__main__":
    B, UR, IR = 4, 8, 16
    F_IN = 32
    H_OUT = 32  # the module's BiLinearInteraction(out_features) forces in_features == out_features

    key = jax.random.PRNGKey(0)
    k_u, k_i, k_wt, k_wg, k_wp, k_wb = jax.random.split(key, 6)

    user_x = jax.random.normal(k_u, (B, UR, F_IN), dtype=jnp.float32)
    item_x = jax.random.normal(k_i, (B, IR, F_IN), dtype=jnp.float32)

    # Deterministic synthetic parameters (uniform init like the torch module).
    b_in = 1.0 / np.sqrt(F_IN)
    b_out = 1.0 / np.sqrt(H_OUT)
    w_trans = jax.random.uniform(k_wt, (H_OUT, F_IN), jnp.float32, -b_in, b_in)
    w_gate = jax.random.uniform(k_wg, (H_OUT, F_IN), jnp.float32, -b_in, b_in)
    w_proj = jax.random.uniform(k_wp, (1, H_OUT), jnp.float32, -b_out, b_out)
    w_bilinear = jax.random.uniform(k_wb, (H_OUT, H_OUT), jnp.float32, -b_out, b_out)

    # Deterministic ragged masks (True = valid review).
    user_lens = jnp.array([UR, 6, UR, 5])
    item_lens = jnp.array([IR, IR, 10, 12])
    user_masks = jnp.arange(UR)[None, :] < user_lens[:, None]
    item_masks = jnp.arange(IR)[None, :] < item_lens[:, None]

    uo, io, uw, iw = unbalanced_coattention(
        user_x, item_x, user_masks, item_masks,
        w_trans, w_gate, w_proj, w_bilinear, block_b=2)
    uo, io, uw, iw = jax.block_until_ready((uo, io, uw, iw))

    ruo, rio, ruw, riw = unbalanced_coattention_reference(
        user_x, item_x, user_masks, item_masks,
        w_trans, w_gate, w_proj, w_bilinear)

    np.testing.assert_allclose(np.asarray(uo), np.asarray(ruo), rtol=2e-5, atol=2e-5)
    np.testing.assert_allclose(np.asarray(io), np.asarray(rio), rtol=2e-5, atol=2e-5)
    np.testing.assert_allclose(np.asarray(uw), np.asarray(ruw), rtol=2e-5, atol=2e-5)
    np.testing.assert_allclose(np.asarray(iw), np.asarray(riw), rtol=2e-5, atol=2e-5)

    print("KERNEL_OK")
</pallas_src>

<mosaic_0001>
module attributes {stable_mosaic.version = 11 : i64} {
  func.func @coattention_kernel(%arg0: i32, %arg1: memref<2x8x32xf32, #tpu.memory_space<vmem>>, %arg2: memref<2x16x32xf32, #tpu.memory_space<vmem>>, %arg3: memref<2x1x8xf32, #tpu.memory_space<vmem>>, %arg4: memref<2x1x16xf32, #tpu.memory_space<vmem>>, %arg5: memref<32x64xf32, #tpu.memory_space<vmem>>, %arg6: memref<2x1x32xf32, #tpu.memory_space<vmem>>, %arg7: memref<32x32xf32, #tpu.memory_space<vmem>>, %arg8: memref<2x1x32xf32, #tpu.memory_space<vmem>>, %arg9: memref<2x1x32xf32, #tpu.memory_space<vmem>>, %arg10: memref<2x1x8xf32, #tpu.memory_space<vmem>>, %arg11: memref<2x1x16xf32, #tpu.memory_space<vmem>>) attributes {dimension_semantics = [#tpu.dimension_semantics<parallel>], iteration_bounds = array<i64: 2>, scalar_prefetch = 0 : i64, scratch_operands = 0 : i64, tpu.core_type = #tpu.core_type<tc>, window_params = [{transform_indices = @transform_0, window_bounds = array<i64: 2, 8, 32>}, {transform_indices = @transform_1, window_bounds = array<i64: 2, 16, 32>}, {transform_indices = @transform_2, window_bounds = array<i64: 2, 1, 8>}, {transform_indices = @transform_3, window_bounds = array<i64: 2, 1, 16>}, {pipeline_mode = #tpu.pipeline_mode<synchronous>, transform_indices = @transform_4, window_bounds = array<i64: 32, 64>}, {pipeline_mode = #tpu.pipeline_mode<synchronous>, transform_indices = @transform_5, window_bounds = array<i64: 2, 1, 32>}, {pipeline_mode = #tpu.pipeline_mode<synchronous>, transform_indices = @transform_6, window_bounds = array<i64: 32, 32>}, {transform_indices = @transform_7, window_bounds = array<i64: 2, 1, 32>}, {transform_indices = @transform_8, window_bounds = array<i64: 2, 1, 32>}, {transform_indices = @transform_9, window_bounds = array<i64: 2, 1, 8>}, {transform_indices = @transform_10, window_bounds = array<i64: 2, 1, 16>}]} {
    %c0 = arith.constant 0 : index
    %c0_0 = arith.constant 0 : index
    %c0_1 = arith.constant 0 : index
    %0 = vector.load %arg1[%c0, %c0_0, %c0_1] : memref<2x8x32xf32, #tpu.memory_space<vmem>>, vector<2x8x32xf32>
    %c0_2 = arith.constant 0 : index
    %c0_3 = arith.constant 0 : index
    %c0_4 = arith.constant 0 : index
    %1 = vector.load %arg2[%c0_2, %c0_3, %c0_4] : memref<2x16x32xf32, #tpu.memory_space<vmem>>, vector<2x16x32xf32>
    %2 = vector.shape_cast %1 : vector<2x16x32xf32> to vector<32x32xf32>
    %c0_5 = arith.constant 0 : index
    %c0_6 = arith.constant 0 : index
    %3 = vector.load %arg5[%c0_5, %c0_6] : memref<32x64xf32, #tpu.memory_space<vmem>>, vector<32x64xf32>
    %cst = arith.constant dense<0.000000e+00> : vector<32x64xf32>
    %4 = tpu.matmul %2, %3, %cst {dimension_numbers = #tpu.dot_dimension_numbers<[1], [0], [0], [1], [0, 0, 1, 1], [], []>} : vector<32x32xf32>, vector<32x64xf32>, vector<32x64xf32> -> vector<32x64xf32>
    %5 = vector.extract_strided_slice %4 {offsets = [0, 0], sizes = [32, 32], strides = [1, 1]} : vector<32x64xf32> to vector<32x32xf32>
    %6 = math.tanh %5 : vector<32x32xf32>
    %7 = vector.extract_strided_slice %4 {offsets = [0, 32], sizes = [32, 32], strides = [1, 1]} : vector<32x64xf32> to vector<32x32xf32>
    %8 = arith.negf %7 : vector<32x32xf32>
    %9 = math.exp %8 : vector<32x32xf32>
    %cst_7 = arith.constant 1.000000e+00 : f32
    %10 = vector.broadcast %cst_7 : f32 to vector<32x32xf32>
    %11 = arith.addf %10, %9 : vector<32x32xf32>
    %12 = arith.divf %10, %11 : vector<32x32xf32>
    %13 = arith.mulf %6, %12 : vector<32x32xf32>
    %14 = vector.shape_cast %13 : vector<32x32xf32> to vector<2x16x32xf32>
    %c0_8 = arith.constant 0 : index
    %c0_9 = arith.constant 0 : index
    %c0_10 = arith.constant 0 : index
    %15 = vector.load %arg6[%c0_8, %c0_9, %c0_10] : memref<2x1x32xf32, #tpu.memory_space<vmem>>, vector<2x1x32xf32>
    "tpu.trace_start"() <{level = 10 : i32, message = "bqh,bkh->bqk"}> : () -> ()
    %cst_11 = arith.constant dense<0.000000e+00> : vector<2x1x16xf32>
    %16 = tpu.matmul %15, %14, %cst_11 {dimension_numbers = #tpu.dot_dimension_numbers<[2], [2], [1], [1], [0, 0, 0, 1, 1, 1], [0], [0]>} : vector<2x1x32xf32>, vector<2x16x32xf32>, vector<2x1x16xf32> -> vector<2x1x16xf32>
    "tpu.trace_stop"() : () -> ()
    %c0_12 = arith.constant 0 : index
    %c0_13 = arith.constant 0 : index
    %c0_14 = arith.constant 0 : index
    %17 = vector.load %arg4[%c0_12, %c0_13, %c0_14] : memref<2x1x16xf32, #tpu.memory_space<vmem>>, vector<2x1x16xf32>
    %cst_15 = arith.constant 0.000000e+00 : f32
    %18 = vector.broadcast %cst_15 : f32 to vector<2x1x16xf32>
    %19 = arith.cmpf ogt, %17, %18 : vector<2x1x16xf32>
    %cst_16 = arith.constant -1.000000e+08 : f32
    %20 = vector.broadcast %cst_16 : f32 to vector<2x1x16xf32>
    %21 = arith.select %19, %16, %20 : vector<2x1x16xi1>, vector<2x1x16xf32>
    %cst_17 = arith.constant dense<0xFF800000> : vector<2x1xf32>
    %22 = vector.multi_reduction <maximumf>, %21, %cst_17 [2] : vector<2x1x16xf32> to vector<2x1xf32>
    %23 = vector.shape_cast %22 : vector<2x1xf32> to vector<2x1x1xf32>
    %24 = vector.broadcast %23 : vector<2x1x1xf32> to vector<2x1x16xf32>
    %25 = arith.subf %21, %24 : vector<2x1x16xf32>
    %26 = math.exp %25 : vector<2x1x16xf32>
    %cst_18 = arith.constant dense<0.000000e+00> : vector<2x1xf32>
    %27 = vector.multi_reduction <add>, %26, %cst_18 [2] : vector<2x1x16xf32> to vector<2x1xf32>
    %28 = vector.shape_cast %27 : vector<2x1xf32> to vector<2x1x1xf32>
    %29 = vector.broadcast %28 : vector<2x1x1xf32> to vector<2x1x16xf32>
    %30 = arith.divf %26, %29 : vector<2x1x16xf32>
    %c0_19 = arith.constant 0 : index
    %c0_20 = arith.constant 0 : index
    %c0_21 = arith.constant 0 : index
    %31 = vector.load %arg11[%c0_19, %c0_20, %c0_21] : memref<2x1x16xf32, #tpu.memory_space<vmem>>, vector<2x1x16xf32>
    tpu.vector_store %arg11[%c0_19, %c0_20, %c0_21], %30 {strides = array<i32>} : memref<2x1x16xf32, #tpu.memory_space<vmem>>, vector<2x1x16xf32>,
    "tpu.trace_start"() <{level = 10 : i32, message = "bqk,bkd->bqd"}> : () -> ()
    %cst_22 = arith.constant dense<0.000000e+00> : vector<2x1x32xf32>
    %32 = tpu.matmul %30, %1, %cst_22 {dimension_numbers = #tpu.dot_dimension_numbers<[2], [1], [1], [2], [0, 0, 0, 1, 1, 2], [0], [0]>} : vector<2x1x16xf32>, vector<2x16x32xf32>, vector<2x1x32xf32> -> vector<2x1x32xf32>
    "tpu.trace_stop"() : () -> ()
    %c0_23 = arith.constant 0 : index
    %c0_24 = arith.constant 0 : index
    %c0_25 = arith.constant 0 : index
    %33 = vector.load %arg9[%c0_23, %c0_24, %c0_25] : memref<2x1x32xf32, #tpu.memory_space<vmem>>, vector<2x1x32xf32>
    tpu.vector_store %arg9[%c0_23, %c0_24, %c0_25], %32 {strides = array<i32>} : memref<2x1x32xf32, #tpu.memory_space<vmem>>, vector<2x1x32xf32>,
    %34 = vector.shape_cast %0 : vector<2x8x32xf32> to vector<16x32xf32>
    %c0_26 = arith.constant 0 : index
    %c0_27 = arith.constant 0 : index
    %35 = vector.load %arg7[%c0_26, %c0_27] : memref<32x32xf32, #tpu.memory_space<vmem>>, vector<32x32xf32>
    %cst_28 = arith.constant dense<0.000000e+00> : vector<16x32xf32>
    %36 = tpu.matmul %34, %35, %cst_28 {dimension_numbers = #tpu.dot_dimension_numbers<[1], [0], [0], [1], [0, 0, 1, 1], [], []>} : vector<16x32xf32>, vector<32x32xf32>, vector<16x32xf32> -> vector<16x32xf32>
    %37 = vector.shape_cast %36 : vector<16x32xf32> to vector<2x8x32xf32>
    "tpu.trace_start"() <{level = 10 : i32, message = "bqd,bkd->bqk"}> : () -> ()
    %cst_29 = arith.constant dense<0.000000e+00> : vector<2x16x8xf32>
    %38 = tpu.matmul %1, %37, %cst_29 {dimension_numbers = #tpu.dot_dimension_numbers<[2], [2], [1], [1], [0, 0, 0, 1, 1, 1], [0], [0]>} : vector<2x16x32xf32>, vector<2x8x32xf32>, vector<2x16x8xf32> -> vector<2x16x8xf32>
    "tpu.trace_stop"() : () -> ()
    %cst_30 = arith.constant dense<0xFF800000> : vector<2x8xf32>
    %39 = vector.multi_reduction <maximumf>, %38, %cst_30 [1] : vector<2x16x8xf32> to vector<2x8xf32>
    %40 = vector.shape_cast %39 : vector<2x8xf32> to vector<2x1x8xf32>
    %c0_31 = arith.constant 0 : index
    %c0_32 = arith.constant 0 : index
    %c0_33 = arith.constant 0 : index
    %41 = vector.load %arg3[%c0_31, %c0_32, %c0_33] : memref<2x1x8xf32, #tpu.memory_space<vmem>>, vector<2x1x8xf32>
    %cst_34 = arith.constant 0.000000e+00 : f32
    %42 = vector.broadcast %cst_34 : f32 to vector<2x1x8xf32>
    %43 = arith.cmpf ogt, %41, %42 : vector<2x1x8xf32>
    %cst_35 = arith.constant -1.000000e+08 : f32
    %44 = vector.broadcast %cst_35 : f32 to vector<2x1x8xf32>
    %45 = arith.select %43, %40, %44 : vector<2x1x8xi1>, vector<2x1x8xf32>
    %cst_36 = arith.constant dense<0xFF800000> : vector<2x1xf32>
    %46 = vector.multi_reduction <maximumf>, %45, %cst_36 [2] : vector<2x1x8xf32> to vector<2x1xf32>
    %47 = vector.shape_cast %46 : vector<2x1xf32> to vector<2x1x1xf32>
    %48 = vector.broadcast %47 : vector<2x1x1xf32> to vector<2x1x8xf32>
    %49 = arith.subf %45, %48 : vector<2x1x8xf32>
    %50 = math.exp %49 : vector<2x1x8xf32>
    %cst_37 = arith.constant dense<0.000000e+00> : vector<2x1xf32>
    %51 = vector.multi_reduction <add>, %50, %cst_37 [2] : vector<2x1x8xf32> to vector<2x1xf32>
    %52 = vector.shape_cast %51 : vector<2x1xf32> to vector<2x1x1xf32>
    %53 = vector.broadcast %52 : vector<2x1x1xf32> to vector<2x1x8xf32>
    %54 = arith.divf %50, %53 : vector<2x1x8xf32>
    %c0_38 = arith.constant 0 : index
    %c0_39 = arith.constant 0 : index
    %c0_40 = arith.constant 0 : index
    %55 = vector.load %arg10[%c0_38, %c0_39, %c0_40] : memref<2x1x8xf32, #tpu.memory_space<vmem>>, vector<2x1x8xf32>
    tpu.vector_store %arg10[%c0_38, %c0_39, %c0_40], %54 {strides = array<i32>} : memref<2x1x8xf32, #tpu.memory_space<vmem>>, vector<2x1x8xf32>,
    "tpu.trace_start"() <{level = 10 : i32, message = "bqk,bkd->bqd"}> : () -> ()
    %cst_41 = arith.constant dense<0.000000e+00> : vector<2x1x32xf32>
    %56 = tpu.matmul %54, %0, %cst_41 {dimension_numbers = #tpu.dot_dimension_numbers<[2], [1], [1], [2], [0, 0, 0, 1, 1, 2], [0], [0]>} : vector<2x1x8xf32>, vector<2x8x32xf32>, vector<2x1x32xf32> -> vector<2x1x32xf32>
    "tpu.trace_stop"() : () -> ()
    %c0_42 = arith.constant 0 : index
    %c0_43 = arith.constant 0 : index
    %c0_44 = arith.constant 0 : index
    %57 = vector.load %arg8[%c0_42, %c0_43, %c0_44] : memref<2x1x32xf32, #tpu.memory_space<vmem>>, vector<2x1x32xf32>
    tpu.vector_store %arg8[%c0_42, %c0_43, %c0_44], %56 {strides = array<i32>} : memref<2x1x32xf32, #tpu.memory_space<vmem>>, vector<2x1x32xf32>,
    return
  }
  func.func @transform_0(%arg0: i32) -> (i32, i32, i32) {
    %c0_i32 = arith.constant 0 : i32
    %c0_i32_0 = arith.constant 0 : i32
    %c0_i32_1 = arith.constant 0 : i32
    return %arg0, %c0_i32, %c0_i32_0 : i32, i32, i32
  }
  func.func @transform_1(%arg0: i32) -> (i32, i32, i32) {
    %c0_i32 = arith.constant 0 : i32
    %c0_i32_0 = arith.constant 0 : i32
    %c0_i32_1 = arith.constant 0 : i32
    return %arg0, %c0_i32, %c0_i32_0 : i32, i32, i32
  }
  func.func @transform_2(%arg0: i32) -> (i32, i32, i32) {
    %c0_i32 = arith.constant 0 : i32
    %c0_i32_0 = arith.constant 0 : i32
    %c0_i32_1 = arith.constant 0 : i32
    return %arg0, %c0_i32, %c0_i32_0 : i32, i32, i32
  }
  func.func @transform_3(%arg0: i32) -> (i32, i32, i32) {
    %c0_i32 = arith.constant 0 : i32
    %c0_i32_0 = arith.constant 0 : i32
    %c0_i32_1 = arith.constant 0 : i32
    return %arg0, %c0_i32, %c0_i32_0 : i32, i32, i32
  }
  func.func @transform_4(%arg0: i32) -> (i32, i32) {
    %c0_i32 = arith.constant 0 : i32
    %c0_i32_0 = arith.constant 0 : i32
    %c0_i32_1 = arith.constant 0 : i32
    return %c0_i32, %c0_i32_0 : i32, i32
  }
  func.func @transform_5(%arg0: i32) -> (i32, i32, i32) {
    %c0_i32 = arith.constant 0 : i32
    %c0_i32_0 = arith.constant 0 : i32
    %c0_i32_1 = arith.constant 0 : i32
    %c0_i32_2 = arith.constant 0 : i32
    return %c0_i32, %c0_i32_0, %c0_i32_1 : i32, i32, i32
  }
  func.func @transform_6(%arg0: i32) -> (i32, i32) {
    %c0_i32 = arith.constant 0 : i32
    %c0_i32_0 = arith.constant 0 : i32
    %c0_i32_1 = arith.constant 0 : i32
    return %c0_i32, %c0_i32_0 : i32, i32
  }
  func.func @transform_7(%arg0: i32) -> (i32, i32, i32) {
    %c0_i32 = arith.constant 0 : i32
    %c0_i32_0 = arith.constant 0 : i32
    %c0_i32_1 = arith.constant 0 : i32
    return %arg0, %c0_i32, %c0_i32_0 : i32, i32, i32
  }
  func.func @transform_8(%arg0: i32) -> (i32, i32, i32) {
    %c0_i32 = arith.constant 0 : i32
    %c0_i32_0 = arith.constant 0 : i32
    %c0_i32_1 = arith.constant 0 : i32
    return %arg0, %c0_i32, %c0_i32_0 : i32, i32, i32
  }
  func.func @transform_9(%arg0: i32) -> (i32, i32, i32) {
    %c0_i32 = arith.constant 0 : i32
    %c0_i32_0 = arith.constant 0 : i32
    %c0_i32_1 = arith.constant 0 : i32
    return %arg0, %c0_i32, %c0_i32_0 : i32, i32, i32
  }
  func.func @transform_10(%arg0: i32) -> (i32, i32, i32) {
    %c0_i32 = arith.constant 0 : i32
    %c0_i32_0 = arith.constant 0 : i32
    %c0_i32_1 = arith.constant 0 : i32
    return %arg0, %c0_i32, %c0_i32_0 : i32, i32, i32
  }
}

</mosaic_0001>

<llo_original>
// kernel: tpu_custom_call.1
$region0: #{tpu_custom_call.1}
  #allocation0 [shape = 'u32[]', space=smem, size = 0x4, offset = 0x4, fixed_abs, tag = 'smem constant byte address 0x4 - core index']
  #allocation1 [shape = 'u32[144,128]{1,0:T(1,128)}', space=vmem, size = 0x12000, scoped, tag = 'internal scratch']
  %s0 = inlined_call_operand.hbm [shape: f32[4,8,32], index: 0, kind: input, shape index: {}]
  %s1 = inlined_call_operand.hbm [shape: f32[4,16,32], index: 1, kind: input, shape index: {}]
  %s2 = inlined_call_operand.vmem [shape: f32[4,1,8], index: 2, kind: input, shape index: {}]
  %s3 = inlined_call_operand.vmem [shape: f32[4,1,16], index: 3, kind: input, shape index: {}]
  %s4 = inlined_call_operand.hbm [shape: f32[32,64], index: 4, kind: input, shape index: {}]
  %s5 = inlined_call_operand.vmem [shape: f32[2,1,32], index: 5, kind: input, shape index: {}]
  %s6 = inlined_call_operand.hbm [shape: f32[32,32], index: 6, kind: input, shape index: {}]
  %s7 = inlined_call_operand.hbm [shape: f32[4,1,32], index: 7, kind: output, shape index: {0}]
  %s8 = inlined_call_operand.hbm [shape: f32[4,1,32], index: 8, kind: output, shape index: {1}]
  %s9 = inlined_call_operand.hbm [shape: f32[4,1,8], index: 9, kind: output, shape index: {2}]
  %s10 = inlined_call_operand.hbm [shape: f32[4,1,16], index: 10, kind: output, shape index: {3}]
  %11 = xla_tuple %s7, %s8, %s9, %s10
  %s12 = sld [smem:[#allocation0]]
  $region101: #{tpu_custom_call.1} parent=0
    _
  %s14 = ssub.s32 1, %s12
  %s15 = scalar_select 0, %s14, %s12
  $region1: #{tpu_custom_call.1} parent=0
    #allocation2 [shape = 'u8[16384]{0}', space=vmem, size = 0x4000, scoped, tag = 'input window, operand 0']
    #allocation3 [shape = 's32[2]{0}', space=sflag, size = 0x8, scoped, tag = 'scoped memory for tpu_custom_call.1']
    #allocation4 [shape = 's32[2]{0}', space=sflag, size = 0x8, scoped, tag = 'scoped memory for tpu_custom_call.1']
    #allocation5 [shape = 'u8[32768]{0}', space=vmem, size = 0x8000, scoped, tag = 'input window, operand 1']
    #allocation6 [shape = 's32[2]{0}', space=sflag, size = 0x8, scoped, tag = 'scoped memory for tpu_custom_call.1']
    #allocation7 [shape = 'u8[16384]{0}', space=vmem, size = 0x4000, scoped, tag = 'input window, operand 4, single buffered']
    #allocation8 [shape = 'u8[16384]{0}', space=vmem, size = 0x4000, scoped, tag = 'input window, operand 6, single buffered']
    #allocation9 [shape = 's32[1]{0}', space=sflag, size = 0x4, scoped, tag = 'scoped memory for tpu_custom_call.1']
    #allocation10 [shape = 'u8[2048]{0}', space=vmem, size = 0x800, scoped, tag = 'output window, operand 0']
    #allocation11 [shape = 'u8[2048]{0}', space=vmem, size = 0x800, scoped, tag = 'output window, operand 1']
    #allocation12 [shape = 's32[2]{0}', space=sflag, size = 0x8, scoped, tag = 'scoped memory for tpu_custom_call.1']
    #allocation13 [shape = 'u8[2048]{0}', space=vmem, size = 0x800, scoped, tag = 'output window, operand 2']
    #allocation14 [shape = 'u8[2048]{0}', space=vmem, size = 0x800, scoped, tag = 'output window, operand 3']
    #allocation15 [shape = 's32[2]{0}', space=sflag, size = 0x8, scoped, tag = 'scoped memory for tpu_custom_call.1']
    %16 = vsyncpa [#allocation3], 0
    %s17 = scalar_lea.sflag [#allocation3], 1
    %18 = vsyncpa %s17, 0
    %19 = vsyncpa [#allocation6], 0
    %s20 = scalar_lea.sflag [#allocation6], 1
    %21 = vsyncpa %s20, 0
    %22 = vsyncpa [#allocation9], 0
    %23 = vsyncpa [#allocation4], 0
    %s24 = scalar_lea.sflag [#allocation4], 1
    %25 = vsyncpa %s24, 0
    %26 = vsyncpa [#allocation12], 0
    %s27 = scalar_lea.sflag [#allocation12], 1
    %28 = vsyncpa %s27, 0
    %29 = vsyncpa [#allocation15], 0
    %s30 = scalar_lea.sflag [#allocation15], 1
    %31 = vsyncpa %s30, 0
    loop: start=0, step=1, limit=4
    $region2: #{tpu_custom_call.1} parent=1 // loop_pre_header
      _
    $region3: #{tpu_custom_call.1} parent=1 // loop_header
      %s33 = sphi 0, %s37
      %p34 = scmp.ge.s32.totalorder %s33, 4
      %s43 = sphi 0, %s45
      %s46 = sphi 0, %s43
      %s47 = sphi 0, %s46
      %s63 = sphi 0, %s47
      %s69 = sphi 0, %s71
      %s72 = sphi 0, %s69
      %s73 = sphi 0, %s72
      %s89 = sphi 0, %s73
      %s95 = sphi 0, %s97
      %s98 = sphi 0, %s95
      %s99 = sphi 0, %s98
      %s115 = sphi 0, %s99
      %s121 = sphi 0, %s123
      %s124 = sphi 0, %s121
      %s125 = sphi 0, %s124
      %s141 = sphi 0, %s125
      %s145 = sphi 0, %s145
      %s147 = sphi 0, %s145
      %s148 = sphi 0, %s147
      %s162 = sphi 0, %s148
      %s166 = sphi 0, %s166
      %s168 = sphi 0, %s166
      %s169 = sphi 0, %s168
      %s183 = sphi 0, %s169
      %s187 = sphi 0, %s187
      %s189 = sphi 0, %s187
      %s190 = sphi 0, %s189
      %s204 = sphi 0, %s190
      %s210 = sphi 0, %s212
      %s213 = sphi 0, %s210
      %s214 = sphi 0, %s213
      %s230 = sphi 0, %s214
      %s236 = sphi 0, %s238
      %s239 = sphi 0, %s236
      %s240 = sphi 0, %s239
      %s256 = sphi 0, %s240
      %s262 = sphi 0, %s264
      %s265 = sphi 0, %s262
      %s266 = sphi 0, %s265
      %s282 = sphi 0, %s266
      %s288 = sphi 0, %s290
      %s291 = sphi 0, %s288
      %s292 = sphi 0, %s291
      %s308 = sphi 0, %s292
    $region4: #{tpu_custom_call.1} parent=1 // loop_header_branch
      %36 = sbr.rel (%p34) target = $region8
    $region5: #{tpu_custom_call.1} parent=1 // loop_body
      %s38 = ssub.s32 %s33, 1
      %s39 = ssub.s32 %s33, 2
      %s40 = sadd.s32 %s33, 1
      %s41 = ssub.s32 %s33, %s40
      %p42 = scmp.eq.s32.totalorder %s41, 0
      %s44 = sadd.s32 %s43, 1
      %s45 = scalar_select %p42, %s43, %s44
      %p48 = pneg %p42
      %p49 = scmp.eq.s32.totalorder %s33, 1
      %p50 = por %p48, %p49
      %p51 = scmp.ne.s32.totalorder %s43, %s46
      %p52 = scmp.eq.s32.totalorder %s33, 0
      %p53 = por %p51, %p52
      %p54 = scmp.ne.s32.totalorder %s43, %s46
      %p55 = scmp.eq.s32.totalorder %s38, 1
      %p56 = por %p54, %p55
      %p57 = scmp.ne.s32.totalorder %s46, %s47
      %p58 = scmp.eq.s32.totalorder %s38, 0
      %p59 = por %p57, %p58
      %p60 = scmp.ne.s32.totalorder %s46, %s47
      %p61 = scmp.eq.s32.totalorder %s39, 1
      %p62 = por %p60, %p61
      %p64 = scmp.ne.s32.totalorder %s47, %s63
      %p65 = scmp.eq.s32.totalorder %s39, 0
      %p66 = por %p64, %p65
      %s67 = ssub.s32 %s33, %s40
      %p68 = scmp.eq.s32.totalorder %s67, 0
      %s70 = sadd.s32 %s69, 1
      %s71 = scalar_select %p68, %s69, %s70
      %p74 = pneg %p68
      %p75 = scmp.eq.s32.totalorder %s33, 1
      %p76 = por %p74, %p75
      %p77 = scmp.ne.s32.totalorder %s69, %s72
      %p78 = scmp.eq.s32.totalorder %s33, 0
      %p79 = por %p77, %p78
      %p80 = scmp.ne.s32.totalorder %s69, %s72
      %p81 = scmp.eq.s32.totalorder %s38, 1
      %p82 = por %p80, %p81
      %p83 = scmp.ne.s32.totalorder %s72, %s73
      %p84 = scmp.eq.s32.totalorder %s38, 0
      %p85 = por %p83, %p84
      %p86 = scmp.ne.s32.totalorder %s72, %s73
      %p87 = scmp.eq.s32.totalorder %s39, 1
      %p88 = por %p86, %p87
      %p90 = scmp.ne.s32.totalorder %s73, %s89
      %p91 = scmp.eq.s32.totalorder %s39, 0
      %p92 = por %p90, %p91
      %s93 = ssub.s32 %s33, %s40
      %p94 = scmp.eq.s32.totalorder %s93, 0
      %s96 = sadd.s32 %s95, 1
      %s97 = scalar_select %p94, %s95, %s96
      %p100 = pneg %p94
      %p101 = scmp.eq.s32.totalorder %s33, 1
      %p102 = por %p100, %p101
      %p103 = scmp.ne.s32.totalorder %s95, %s98
      %p104 = scmp.eq.s32.totalorder %s33, 0
      %p105 = por %p103, %p104
      %p106 = scmp.ne.s32.totalorder %s95, %s98
      %p107 = scmp.eq.s32.totalorder %s38, 1
      %p108 = por %p106, %p107
      %p109 = scmp.ne.s32.totalorder %s98, %s99
      %p110 = scmp.eq.s32.totalorder %s38, 0
      %p111 = por %p109, %p110
      %p112 = scmp.ne.s32.totalorder %s98, %s99
      %p113 = scmp.eq.s32.totalorder %s39, 1
      %p114 = por %p112, %p113
      %p116 = scmp.ne.s32.totalorder %s99, %s115
      %p117 = scmp.eq.s32.totalorder %s39, 0
      %p118 = por %p116, %p117
      %s119 = ssub.s32 %s33, %s40
      %p120 = scmp.eq.s32.totalorder %s119, 0
      %s122 = sadd.s32 %s121, 1
      %s123 = scalar_select %p120, %s121, %s122
      %p126 = pneg %p120
      %p127 = scmp.eq.s32.totalorder %s33, 1
      %p128 = por %p126, %p127
      %p129 = scmp.ne.s32.totalorder %s121, %s124
      %p130 = scmp.eq.s32.totalorder %s33, 0
      %p131 = por %p129, %p130
      %p132 = scmp.ne.s32.totalorder %s121, %s124
      %p133 = scmp.eq.s32.totalorder %s38, 1
      %p134 = por %p132, %p133
      %p135 = scmp.ne.s32.totalorder %s124, %s125
      %p136 = scmp.eq.s32.totalorder %s38, 0
      %p137 = por %p135, %p136
      %p138 = scmp.ne.s32.totalorder %s124, %s125
      %p139 = scmp.eq.s32.totalorder %s39, 1
      %p140 = por %p138, %p139
      %p142 = scmp.ne.s32.totalorder %s125, %s141
      %p143 = scmp.eq.s32.totalorder %s39, 0
      %p144 = por %p142, %p143
      %s146 = sadd.s32 %s145, 1
      %p149 = scmp.eq.s32.totalorder %s33, 1
      %p150 = scmp.ne.s32.totalorder %s145, %s147
      %p151 = scmp.eq.s32.totalorder %s33, 0
      %p152 = por %p150, %p151
      %p153 = scmp.ne.s32.totalorder %s145, %s147
      %p154 = scmp.eq.s32.totalorder %s38, 1
      %p155 = por %p153, %p154
      %p156 = scmp.ne.s32.totalorder %s147, %s148
      %p157 = scmp.eq.s32.totalorder %s38, 0
      %p158 = por %p156, %p157
      %p159 = scmp.ne.s32.totalorder %s147, %s148
      %p160 = scmp.eq.s32.totalorder %s39, 1
      %p161 = por %p159, %p160
      %p163 = scmp.ne.s32.totalorder %s148, %s162
      %p164 = scmp.eq.s32.totalorder %s39, 0
      %p165 = por %p163, %p164
      %s167 = sadd.s32 %s166, 1
      %p170 = scmp.eq.s32.totalorder %s33, 1
      %p171 = scmp.ne.s32.totalorder %s166, %s168
      %p172 = scmp.eq.s32.totalorder %s33, 0
      %p173 = por %p171, %p172
      %p174 = scmp.ne.s32.totalorder %s166, %s168
      %p175 = scmp.eq.s32.totalorder %s38, 1
      %p176 = por %p174, %p175
      %p177 = scmp.ne.s32.totalorder %s168, %s169
      %p178 = scmp.eq.s32.totalorder %s38, 0
      %p179 = por %p177, %p178
      %p180 = scmp.ne.s32.totalorder %s168, %s169
      %p181 = scmp.eq.s32.totalorder %s39, 1
      %p182 = por %p180, %p181
      %p184 = scmp.ne.s32.totalorder %s169, %s183
      %p185 = scmp.eq.s32.totalorder %s39, 0
      %p186 = por %p184, %p185
      %s188 = sadd.s32 %s187, 1
      %p191 = scmp.eq.s32.totalorder %s33, 1
      %p192 = scmp.ne.s32.totalorder %s187, %s189
      %p193 = scmp.eq.s32.totalorder %s33, 0
      %p194 = por %p192, %p193
      %p195 = scmp.ne.s32.totalorder %s187, %s189
      %p196 = scmp.eq.s32.totalorder %s38, 1
      %p197 = por %p195, %p196
      %p198 = scmp.ne.s32.totalorder %s189, %s190
      %p199 = scmp.eq.s32.totalorder %s38, 0
      %p200 = por %p198, %p199
      %p201 = scmp.ne.s32.totalorder %s189, %s190
      %p202 = scmp.eq.s32.totalorder %s39, 1
      %p203 = por %p201, %p202
      %p205 = scmp.ne.s32.totalorder %s190, %s204
      %p206 = scmp.eq.s32.totalorder %s39, 0
      %p207 = por %p205, %p206
      %s208 = ssub.s32 %s33, %s40
      %p209 = scmp.eq.s32.totalorder %s208, 0
      %s211 = sadd.s32 %s210, 1
      %s212 = scalar_select %p209, %s210, %s211
      %p215 = pneg %p209
      %p216 = scmp.eq.s32.totalorder %s33, 1
      %p217 = por %p215, %p216
      %p218 = scmp.ne.s32.totalorder %s210, %s213
      %p219 = scmp.eq.s32.totalorder %s33, 0
      %p220 = por %p218, %p219
      %p221 = scmp.ne.s32.totalorder %s210, %s213
      %p222 = scmp.eq.s32.totalorder %s38, 1
      %p223 = por %p221, %p222
      %p224 = scmp.ne.s32.totalorder %s213, %s214
      %p225 = scmp.eq.s32.totalorder %s38, 0
      %p226 = por %p224, %p225
      %p227 = scmp.ne.s32.totalorder %s213, %s214
      %p228 = scmp.eq.s32.totalorder %s39, 1
      %p229 = por %p227, %p228
      %p231 = scmp.ne.s32.totalorder %s214, %s230
      %p232 = scmp.eq.s32.totalorder %s39, 0
      %p233 = por %p231, %p232
      %s234 = ssub.s32 %s33, %s40
      %p235 = scmp.eq.s32.totalorder %s234, 0
      %s237 = sadd.s32 %s236, 1
      %s238 = scalar_select %p235, %s236, %s237
      %p241 = pneg %p235
      %p242 = scmp.eq.s32.totalorder %s33, 1
      %p243 = por %p241, %p242
      %p244 = scmp.ne.s32.totalorder %s236, %s239
      %p245 = scmp.eq.s32.totalorder %s33, 0
      %p246 = por %p244, %p245
      %p247 = scmp.ne.s32.totalorder %s236, %s239
      %p248 = scmp.eq.s32.totalorder %s38, 1
      %p249 = por %p247, %p248
      %p250 = scmp.ne.s32.totalorder %s239, %s240
      %p251 = scmp.eq.s32.totalorder %s38, 0
      %p252 = por %p250, %p251
      %p253 = scmp.ne.s32.totalorder %s239, %s240
      %p254 = scmp.eq.s32.totalorder %s39, 1
      %p255 = por %p253, %p254
      %p257 = scmp.ne.s32.totalorder %s240, %s256
      %p258 = scmp.eq.s32.totalorder %s39, 0
      %p259 = por %p257, %p258
      %s260 = ssub.s32 %s33, %s40
      %p261 = scmp.eq.s32.totalorder %s260, 0
      %s263 = sadd.s32 %s262, 1
      %s264 = scalar_select %p261, %s262, %s263
      %p267 = pneg %p261
      %p268 = scmp.eq.s32.totalorder %s33, 1
      %p269 = por %p267, %p268
      %p270 = scmp.ne.s32.totalorder %s262, %s265
      %p271 = scmp.eq.s32.totalorder %s33, 0
      %p272 = por %p270, %p271
      %p273 = scmp.ne.s32.totalorder %s262, %s265
      %p274 = scmp.eq.s32.totalorder %s38, 1
      %p275 = por %p273, %p274
      %p276 = scmp.ne.s32.totalorder %s265, %s266
      %p277 = scmp.eq.s32.totalorder %s38, 0
      %p278 = por %p276, %p277
      %p279 = scmp.ne.s32.totalorder %s265, %s266
      %p280 = scmp.eq.s32.totalorder %s39, 1
      %p281 = por %p279, %p280
      %p283 = scmp.ne.s32.totalorder %s266, %s282
      %p284 = scmp.eq.s32.totalorder %s39, 0
      %p285 = por %p283, %p284
      %s286 = ssub.s32 %s33, %s40
      %p287 = scmp.eq.s32.totalorder %s286, 0
      %s289 = sadd.s32 %s288, 1
      %s290 = scalar_select %p287, %s288, %s289
      %p293 = pneg %p287
      %p294 = scmp.eq.s32.totalorder %s33, 1
      %p295 = por %p293, %p294
      %p296 = scmp.ne.s32.totalorder %s288, %s291
      %p297 = scmp.eq.s32.totalorder %s33, 0
      %p298 = por %p296, %p297
      %p299 = scmp.ne.s32.totalorder %s288, %s291
      %p300 = scmp.eq.s32.totalorder %s38, 1
      %p301 = por %p299, %p300
      %p302 = scmp.ne.s32.totalorder %s291, %s292
      %p303 = scmp.eq.s32.totalorder %s38, 0
      %p304 = por %p302, %p303
      %p305 = scmp.ne.s32.totalorder %s291, %s292
      %p306 = scmp.eq.s32.totalorder %s39, 1
      %p307 = por %p305, %p306
      %p309 = scmp.ne.s32.totalorder %s292, %s308
      %p310 = scmp.eq.s32.totalorder %s39, 0
      %p311 = por %p309, %p310
      %p312 = scmp.le.s32.totalorder 1, %s33
      %p313 = scmp.lt.s32.totalorder %s33, 3
      %p314 = pnand %p312, %p313
      %p315 = pneg %p314
      // Predicated region
      $region9: #{tpu_custom_call.1} parent=5 // pred_check
        _
      $region10: #{tpu_custom_call.1} parent=5 // pred_check_branch
        %317 = sbr.rel (%p314) target = $region12
      $region11: #{tpu_custom_call.1} parent=5 // pred_region
        %s318 = ssub.s32 %s33, 1
        // Predicated region
        $region13: #{tpu_custom_call.1} parent=11 // pred_check
          %p319 = pneg %p158
        $region14: #{tpu_custom_call.1} parent=11 // pred_check_branch
          %321 = sbr.rel (%p319) target = $region16
        $region15: #{tpu_custom_call.1} parent=11 // pred_region
          %s323 = ssub.s32 512, 512
          %324 = vsyncadd [#allocation6], %s323
          %s325 = sshll.u32 [#allocation7], 4
          %s326 = int_to_ptr.vmem [resolvable:$true] %s325
          %331 = dma.hbm_to_vmem [thread:$0]  %s4, 512, %s326, [#allocation6], 128, 128, 8
        $region16: #{tpu_custom_call.1} parent=11 // pred_fallthru
          _
        // Predicated region
        $region17: #{tpu_custom_call.1} parent=11 // pred_check
          %p332 = pneg %p179
        $region18: #{tpu_custom_call.1} parent=11 // pred_check_branch
          %334 = sbr.rel (%p332) target = $region20
        $region19: #{tpu_custom_call.1} parent=11 // pred_region
          _
        $region20: #{tpu_custom_call.1} parent=11 // pred_fallthru
          _
        // Predicated region
        $region21: #{tpu_custom_call.1} parent=11 // pred_check
          %p335 = pneg %p200
        $region22: #{tpu_custom_call.1} parent=11 // pred_check_branch
          %337 = sbr.rel (%p335) target = $region24
        $region23: #{tpu_custom_call.1} parent=11 // pred_region
          %s339 = ssub.s32 512, 512
          %340 = vsyncadd [#allocation9], %s339
          %s341 = sshll.u32 [#allocation8], 4
          %s342 = int_to_ptr.vmem [resolvable:$true] %s341
          %347 = dma.hbm_to_vmem [thread:$0]  %s6, 512, %s342, [#allocation9], 128, 128, 8
        $region24: #{tpu_custom_call.1} parent=11 // pred_fallthru
          _
      $region12: #{tpu_custom_call.1} parent=5 // pred_fallthru
        _
      %p348 = scmp.lt.s32.totalorder %s33, 2
      // Predicated region
      $region25: #{tpu_custom_call.1} parent=5 // pred_check
        %p349 = pneg %p348
      $region26: #{tpu_custom_call.1} parent=5 // pred_check_branch
        %351 = sbr.rel (%p349) target = $region28
      $region27: #{tpu_custom_call.1} parent=5 // pred_region
        // Predicated region
        $region29: #{tpu_custom_call.1} parent=27 // pred_check
          %p352 = pneg %p53
        $region30: #{tpu_custom_call.1} parent=27 // pred_check_branch
          %354 = sbr.rel (%p352) target = $region32
        $region31: #{tpu_custom_call.1} parent=27 // pred_region
          %s355 = sand.u32 %s43, 1
          %s356 = scalar_lea.sflag [#allocation3], %s355
          %s357 = sand.u32 %s43, 1
          %s358 = smul.addr %s357, 16
          %s359 = scalar_lea.vmem [#allocation2], %s358
          %s360 = smul.u32 2, %s33
          %s362 = ssub.s32 256, 256
          %363 = vsyncadd %s356, %s362
          %s364 = smul.addr %s360, 128
          %s365 = scalar_lea.hbm %s0, %s364
          %s366 = sshll.u32 %s359, 4
          %s367 = int_to_ptr.vmem [resolvable:$true] %s366
          %372 = dma.hbm_to_vmem [thread:$0]  %s365, 256, %s367, %s356, 128, 128, 8
        $region32: #{tpu_custom_call.1} parent=27 // pred_fallthru
          _
        // Predicated region
        $region33: #{tpu_custom_call.1} parent=27 // pred_check
          %p373 = pneg %p79
        $region34: #{tpu_custom_call.1} parent=27 // pred_check_branch
          %375 = sbr.rel (%p373) target = $region36
        $region35: #{tpu_custom_call.1} parent=27 // pred_region
          %s376 = sand.u32 %s33, 1
          %s377 = scalar_lea.sflag [#allocation6], %s376
          %s378 = sand.u32 %s69, 1
          %s379 = smul.addr %s378, 32
          %s380 = scalar_lea.vmem [#allocation5], %s379
          %s381 = smul.u32 2, %s33
          %s383 = ssub.s32 512, 512
          %384 = vsyncadd %s377, %s383
          %s385 = smul.addr %s381, 2
          %s386 = smul.addr %s385, 128
          %s387 = scalar_lea.hbm %s1, %s386
          %s388 = sshll.u32 %s380, 4
          %s389 = int_to_ptr.vmem [resolvable:$true] %s388
          %394 = dma.hbm_to_vmem [thread:$0]  %s387, 512, %s389, %s377, 128, 128, 8
        $region36: #{tpu_custom_call.1} parent=27 // pred_fallthru
          _
        // Predicated region
        $region37: #{tpu_custom_call.1} parent=27 // pred_check
          %p395 = pneg %p105
        $region38: #{tpu_custom_call.1} parent=27 // pred_check_branch
          %397 = sbr.rel (%p395) target = $region40
        $region39: #{tpu_custom_call.1} parent=27 // pred_region
          %s398 = smul.u32 2, %s33
          %p399 = scmp.lt.s32.totalorder %s398, 3
          %s400 = scalar_select %p399, %s398, 3
          %s401 = scalar_lea.vmem %s2, %s400
          %s402 = smul.u32 2, %s33
        $region40: #{tpu_custom_call.1} parent=27 // pred_fallthru
          _
        // Predicated region
        $region41: #{tpu_custom_call.1} parent=27 // pred_check
          %p403 = pneg %p131
        $region42: #{tpu_custom_call.1} parent=27 // pred_check_branch
          %405 = sbr.rel (%p403) target = $region44
        $region43: #{tpu_custom_call.1} parent=27 // pred_region
          %s406 = smul.u32 2, %s33
          %p407 = scmp.lt.s32.totalorder %s406, 3
          %s408 = scalar_select %p407, %s406, 3
          %s409 = scalar_lea.vmem %s3, %s408
          %s410 = smul.u32 2, %s33
        $region44: #{tpu_custom_call.1} parent=27 // pred_fallthru
          _
      $region28: #{tpu_custom_call.1} parent=5 // pred_fallthru
        _
      %p411 = scmp.le.s32.totalorder 1, %s33
      %p412 = scmp.lt.s32.totalorder %s33, 3
      %p413 = pnand %p411, %p412
      %p414 = pneg %p413
      // Predicated region
      $region45: #{tpu_custom_call.1} parent=5 // pred_check
        _
      $region46: #{tpu_custom_call.1} parent=5 // pred_check_branch
        %416 = sbr.rel (%p413) target = $region48
      $region47: #{tpu_custom_call.1} parent=5 // pred_region
        %s417 = ssub.s32 %s33, 1
        %s418 = sand.u32 %s46, 1
        %s419 = scalar_lea.sflag [#allocation3], %s418
        %s420 = sand.u32 %s46, 1
        %s421 = smul.addr %s420, 16
        %s422 = scalar_lea.vmem [#allocation2], %s421
        // Predicated region
        $region49: #{tpu_custom_call.1} parent=47 // pred_check
          %p423 = pneg %p59
        $region50: #{tpu_custom_call.1} parent=47 // pred_check_branch
          %425 = sbr.rel (%p423) target = $region52
        $region51: #{tpu_custom_call.1} parent=47 // pred_region
          %426 = dma.done %s419, 256
        $region52: #{tpu_custom_call.1} parent=47 // pred_fallthru
          _
        %s427 = sand.u32 %s38, 1
        %s428 = scalar_lea.sflag [#allocation6], %s427
        %s429 = sand.u32 %s72, 1
        %s430 = smul.addr %s429, 32
        %s431 = scalar_lea.vmem [#allocation5], %s430
        // Predicated region
        $region53: #{tpu_custom_call.1} parent=47 // pred_check
          %p432 = pneg %p85
        $region54: #{tpu_custom_call.1} parent=47 // pred_check_branch
          %434 = sbr.rel (%p432) target = $region56
        $region55: #{tpu_custom_call.1} parent=47 // pred_region
          %435 = dma.done %s428, 512
        $region56: #{tpu_custom_call.1} parent=47 // pred_fallthru
          _
        // Predicated region
        $region57: #{tpu_custom_call.1} parent=47 // pred_check
          %p436 = pneg %p158
        $region58: #{tpu_custom_call.1} parent=47 // pred_check_branch
          %438 = sbr.rel (%p436) target = $region60
        $region59: #{tpu_custom_call.1} parent=47 // pred_region
          %439 = dma.done [#allocation6], 512
        $region60: #{tpu_custom_call.1} parent=47 // pred_fallthru
          _
        // Predicated region
        $region61: #{tpu_custom_call.1} parent=47 // pred_check
          %p440 = pneg %p200
        $region62: #{tpu_custom_call.1} parent=47 // pred_check_branch
          %442 = sbr.rel (%p440) target = $region64
        $region63: #{tpu_custom_call.1} parent=47 // pred_region
          %443 = dma.done [#allocation9], 512
        $region64: #{tpu_custom_call.1} parent=47 // pred_fallthru
          _
        %s444 = sand.u32 %s46, 1
        %s445 = scalar_lea.sflag [#allocation3], %s444
        %s446 = sand.u32 %s46, 1
        %s447 = smul.addr %s446, 16
        %s448 = scalar_lea.vmem [#allocation2], %s447
        %p449 = pneg %p59
        %p450 = pneg %p56
        %s451 = sand.u32 %s38, 1
        %s452 = scalar_lea.sflag [#allocation6], %s451
        %s453 = sand.u32 %s72, 1
        %s454 = smul.addr %s453, 32
        %s455 = scalar_lea.vmem [#allocation5], %s454
        %p456 = pneg %p85
        %p457 = pneg %p82
        %s458 = smul.u32 2, %s38
        %p459 = scmp.lt.s32.totalorder %s458, 3
        %s460 = scalar_select %p459, %s458, 3
        %s461 = scalar_lea.vmem %s2, %s460
        %p462 = pneg %p111
        %p463 = pneg %p108
        %s464 = smul.u32 2, %s38
        %p465 = scmp.lt.s32.totalorder %s464, 3
        %s466 = scalar_select %p465, %s464, 3
        %s467 = scalar_lea.vmem %s3, %s466
        %p468 = pneg %p137
        %p469 = pneg %p134
        %p470 = pneg %p158
        %p471 = pneg %p155
        %p472 = pneg %p179
        %p473 = pneg %p176
        %p474 = pneg %p200
        %p475 = pneg %p197
        %p476 = pneg %p226
        %p477 = pneg %p223
        %s478 = sand.u32 %s213, 1
        %s479 = scalar_lea.sflag [#allocation4], %s478
        %s480 = sand.u32 %s213, 1
        %s481 = smul.addr %s480, 2
        %s482 = scalar_lea.vmem [#allocation10], %s481
        %p483 = pneg %p252
        %p484 = pneg %p249
        %s485 = sand.u32 %s38, 1
        %s486 = scalar_lea.sflag [#allocation12], %s485
        %s487 = sand.u32 %s239, 1
        %s488 = smul.addr %s487, 2
        %s489 = scalar_lea.vmem [#allocation11], %s488
        %p490 = pneg %p278
        %p491 = pneg %p275
        %s492 = sand.u32 %s38, 1
        %s493 = scalar_lea.sflag [#allocation12], %s492
        %s494 = sand.u32 %s265, 1
        %s495 = smul.addr %s494, 2
        %s496 = scalar_lea.vmem [#allocation13], %s495
        %p497 = pneg %p304
        %p498 = pneg %p301
        %s499 = sand.u32 %s291, 1
        %s500 = scalar_lea.sflag [#allocation15], %s499
        %s501 = sand.u32 %s291, 1
        %s502 = smul.addr %s501, 2
        %s503 = scalar_lea.vmem [#allocation14], %s502
        %s504 = smul.u32 2, %s38
        %s505 = smul.u32 2, %s38
        %s506 = smul.u32 2, %s38
        %p507 = scmp.lt.s32.totalorder %s506, 3
        %s508 = scalar_select %p507, %s506, 3
        %s509 = scalar_lea.vmem %s2, %s508
        %s510 = smul.u32 2, %s38
        %s511 = smul.u32 2, %s38
        %p512 = scmp.lt.s32.totalorder %s511, 3
        %s513 = scalar_select %p512, %s511, 3
        %s514 = scalar_lea.vmem %s3, %s513
        %s515 = smul.u32 2, %s38
        %s516 = smul.u32 2, %s38
        %s517 = smul.u32 2, %s38
        %s518 = smul.u32 2, %s38
        %s519 = smul.u32 2, %s38
        %v520 = vld [vmem:[%s422] sm:$0xff]
        %v521 = vld [vmem:[%s422 + $0x8] sm:$0xff]
        %v522 = vld [vmem:[%s431] sm:$0xff]
        %v523 = vld [vmem:[%s431 + $0x8] sm:$0xff]
        %v524 = vld [vmem:[%s431 + $0x10] sm:$0xff]
        %v525 = vld [vmem:[%s431 + $0x18] sm:$0xff]
        %v526 = vld [vmem:[#allocation7] sm:$0xff]
        %v527 = vld [vmem:[#allocation7 + $0x8] sm:$0xff]
        %v528 = vld [vmem:[#allocation7 + $0x10] sm:$0xff]
        %v529 = vld [vmem:[#allocation7 + $0x18] sm:$0xff]
        %vm530 = vcmask 261120
        %v532 = vsel %vm530, %v522, 0
        %v535 = vsel %vm530, %v523, 0
        %v538 = vsel %vm530, %v524, 0
        %v541 = vsel %vm530, %v525, 0
        %543 = vmatprep.subr.mxu0 0.0
        %544 = vmatpush1.msra.mxu0 %v526
        %545 = vmatprep.subr.mxu0 0.0
        %546 = vmatpush1.msra.mxu0 %v527
        %547 = vmatprep.subr.mxu0 0.0
        %548 = vmatpush1.msra.mxu0 %v528
        %549 = vmatprep.subr.mxu0 0.0
        %550 = vmatpush1.msra.mxu0 %v529
        %551 = vmatprep.subr.mxu0 0.0
        %552 = vmatpush1.msra.mxu0 0.0
        %553 = vmatprep.subr.mxu0 0.0
        %554 = vmatpush1.msra.mxu0 0.0
        %555 = vmatprep.subr.mxu0 0.0
        %556 = vmatpush1.msra.mxu0 0.0
        %557 = vmatprep.subr.mxu0 0.0
        %558 = vmatpush1.msra.mxu0 0.0
        %559 = vmatprep.subr.mxu0 0.0
        %560 = vmatpush1.msra.mxu0 0.0
        %561 = vmatprep.subr.mxu0 0.0
        %562 = vmatpush1.msra.mxu0 0.0
        %563 = vmatprep.subr.mxu0 0.0
        %564 = vmatpush1.msra.mxu0 0.0
        %565 = vmatprep.subr.mxu0 0.0
        %566 = vmatpush1.msra.mxu0 0.0
        %567 = vmatprep.subr.mxu0 0.0
        %568 = vmatpush1.msra.mxu0 0.0
        %569 = vmatprep.subr.mxu0 0.0
        %570 = vmatpush1.msra.mxu0 0.0
        %571 = vmatprep.subr.mxu0 0.0
        %572 = vmatpush1.msra.mxu0 0.0
        %573 = vmatprep.subr.mxu0 0.0
        %574 = vmatpush1.msra.mxu0 0.0
        %575 = vmatprep.subr.mxu0 0.0
        %576 = vmatpush1.msra.mxu0 0.0
        %577 = vmatprep.subr.mxu0 0.0
        %578 = vmatpush1.msra.mxu0 0.0
        %579 = vmatprep.subr.mxu0 0.0
        %580 = vmatpush1.msra.mxu0 0.0
        %581 = vmatprep.subr.mxu0 0.0
        %582 = vmatpush1.msra.mxu0 0.0
        %583 = vmatprep.subr.mxu0 0.0
        %584 = vmatpush1.msra.mxu0 0.0
        %585 = vmatprep.subr.mxu0 0.0
        %586 = vmatpush1.msra.mxu0 0.0
        %587 = vmatprep.subr.mxu0 0.0
        %588 = vmatpush1.msra.mxu0 0.0
        %589 = vmatprep.subr.mxu0 0.0
        %590 = vmatpush1.msra.mxu0 0.0
        %591 = vmatprep.subr.mxu0 0.0
        %592 = vmatpush1.msra.mxu0 0.0
        %593 = vmatprep.subr.mxu0 0.0
        %594 = vmatpush1.msra.mxu0 0.0
        %595 = vmatprep.subr.mxu0 0.0
        %596 = vmatpush1.msra.mxu0 0.0
        %597 = vmatprep.subr.mxu0 0.0
        %598 = vmatpush1.msra.mxu0 0.0
        %599 = vmatprep.subr.mxu0 0.0
        %600 = vmatpush1.msra.mxu0 0.0
        %601 = vmatprep.subr.mxu0 0.0
        %602 = vmatpush1.msra.mxu0 0.0
        %603 = vmatprep.subr.mxu0 0.0
        %604 = vmatpush1.msra.mxu0 0.0
        %605 = vmatprep.subr.mxu0 0.0
        %606 = vmatpush1.msra.mxu0 0.0
        %607 = vmatprep.mubr.f32.mxu0 0.0
        %608 = vmatmul.mubr.f32.gmra.mrb[0].mxu0 %v532
        %v609 = vpop.f32.mrb[0].mxu0
        %v610 = vadd.f32 0.0, %v609
        %v611 = vpop.f32.mrb[0].mxu0
        %612 = vmatprep.mubr.f32.mxu0 0.0
        %613 = vmatmul.mubr.f32.gmra.mrb[0].mxu0 %v535
        %v614 = vpop.f32.mrb[0].mxu0
        %v615 = vadd.f32 0.0, %v614
        %v616 = vpop.f32.mrb[0].mxu0
        %617 = vmatprep.mubr.f32.mxu0 0.0
        %618 = vmatmul.mubr.f32.gmra.mrb[0].mxu0 %v538
        %v619 = vpop.f32.mrb[0].mxu0
        %v620 = vadd.f32 0.0, %v619
        %v621 = vpop.f32.mrb[0].mxu0
        %622 = vmatprep.mubr.f32.mxu0 0.0
        %623 = vmatmul.mubr.f32.gmra.mrb[0].mxu0 %v541
        %v624 = vpop.f32.mrb[0].mxu0
        %v625 = vadd.f32 0.0, %v624
        %v626 = vpop.f32.mrb[0].mxu0
        %627 = vdwg.mxu0
        %v628 = vtanh.pop %v610
        %v629 = vtanh.pop %v615
        %v630 = vtanh.pop %v620
        %v631 = vtanh.pop %v625
        %v632 = vxor.u32 %v610, 2147483648
        %v633 = vxor.u32 %v615, 2147483648
        %v634 = vxor.u32 %v620, 2147483648
        %v635 = vxor.u32 %v625, 2147483648
        %v636 = vmul.f32 %v632, 1.442695
        %v637 = vpow.pop %v636
        %v638 = vmul.f32 %v633, 1.442695
        %v639 = vpow.pop %v638
        %v640 = vmul.f32 %v634, 1.442695
        %v641 = vpow.pop %v640
        %v642 = vmul.f32 %v635, 1.442695
        %v643 = vpow.pop %v642
        %v644 = vadd.f32 %v637, 1.0
        %v645 = vadd.f32 %v639, 1.0
        %v646 = vadd.f32 %v641, 1.0
        %v647 = vadd.f32 %v643, 1.0
        %v648 = vrcp.pop %v644
        %v649 = vmul.f32 1.0, %v648
        %v650 = vrcp.pop %v645
        %v651 = vmul.f32 1.0, %v650
        %v652 = vrcp.pop %v646
        %v653 = vmul.f32 1.0, %v652
        %v654 = vrcp.pop %v647
        %v655 = vmul.f32 1.0, %v654
        %660 = vrot.lane.b32.xlu0 %v649, 96
        %v661 = vpop.permute.xlu0 %660
        %662 = vrot.lane.b32.xlu0 %v651, 96
        %v663 = vpop.permute.xlu0 %662
        %664 = vrot.lane.b32.xlu0 %v653, 96
        %v665 = vpop.permute.xlu0 %664
        %666 = vrot.lane.b32.xlu0 %v655, 96
        %v667 = vpop.permute.xlu0 %666
        %v672 = vmul.f32 %v628, %v661
        %v673 = vmul.f32 %v629, %v663
        %v674 = vmul.f32 %v630, %v665
        %v675 = vmul.f32 %v631, %v667
        %v676 = vld [vmem:[%s5] sm:$0x1]
        %v677 = vld [vmem:[%s5 + $0x1] sm:$0x1]
        %v679 = vsel %vm530, %v676, 0
        %v682 = vsel %vm530, %v672, 0
        %v685 = vsel %vm530, %v673, 0
        %687 = vmatprep.subr.mxu0 0.0
        %688 = vmatpush1.xpose.msra.mxu0 %v682
        %689 = vmatprep.subr.mxu0 0.0
        %690 = vmatpush1.xpose.msra.mxu0 %v685
        %691 = vmatprep.subr.mxu0 0.0
        %692 = vmatpush1.xpose.msra.mxu0 0.0
        %693 = vmatprep.subr.mxu0 0.0
        %694 = vmatpush1.xpose.msra.mxu0 0.0
        %695 = vmatprep.subr.mxu0 0.0
        %696 = vmatpush1.xpose.msra.mxu0 0.0
        %697 = vmatprep.subr.mxu0 0.0
        %698 = vmatpush1.xpose.msra.mxu0 0.0
        %699 = vmatprep.subr.mxu0 0.0
        %700 = vmatpush1.xpose.msra.mxu0 0.0
        %701 = vmatprep.subr.mxu0 0.0
        %702 = vmatpush1.xpose.msra.mxu0 0.0
        %703 = vmatprep.subr.mxu0 0.0
        %704 = vmatpush1.xpose.msra.mxu0 0.0
        %705 = vmatprep.subr.mxu0 0.0
        %706 = vmatpush1.xpose.msra.mxu0 0.0
        %707 = vmatprep.subr.mxu0 0.0
        %708 = vmatpush1.xpose.msra.mxu0 0.0
        %709 = vmatprep.subr.mxu0 0.0
        %710 = vmatpush1.xpose.msra.mxu0 0.0
        %711 = vmatprep.subr.mxu0 0.0
        %712 = vmatpush1.xpose.msra.mxu0 0.0
        %713 = vmatprep.subr.mxu0 0.0
        %714 = vmatpush1.xpose.msra.mxu0 0.0
        %715 = vmatprep.subr.mxu0 0.0
        %716 = vmatpush1.xpose.msra.mxu0 0.0
        %717 = vmatprep.subr.mxu0 0.0
        %718 = vmatpush1.xpose.msra.mxu0 0.0
        %719 = vmatprep.subr.mxu0 0.0
        %720 = vmatpush1.xpose.msra.mxu0 0.0
        %721 = vmatprep.subr.mxu0 0.0
        %722 = vmatpush1.xpose.msra.mxu0 0.0
        %723 = vmatprep.subr.mxu0 0.0
        %724 = vmatpush1.xpose.msra.mxu0 0.0
        %725 = vmatprep.subr.mxu0 0.0
        %726 = vmatpush1.xpose.msra.mxu0 0.0
        %727 = vmatprep.subr.mxu0 0.0
        %728 = vmatpush1.xpose.msra.mxu0 0.0
        %729 = vmatprep.subr.mxu0 0.0
        %730 = vmatpush1.xpose.msra.mxu0 0.0
        %731 = vmatprep.subr.mxu0 0.0
        %732 = vmatpush1.xpose.msra.mxu0 0.0
        %733 = vmatprep.subr.mxu0 0.0
        %734 = vmatpush1.xpose.msra.mxu0 0.0
        %735 = vmatprep.subr.mxu0 0.0
        %736 = vmatpush1.xpose.msra.mxu0 0.0
        %737 = vmatprep.subr.mxu0 0.0
        %738 = vmatpush1.xpose.msra.mxu0 0.0
        %739 = vmatprep.subr.mxu0 0.0
        %740 = vmatpush1.xpose.msra.mxu0 0.0
        %741 = vmatprep.subr.mxu0 0.0
        %742 = vmatpush1.xpose.msra.mxu0 0.0
        %743 = vmatprep.subr.mxu0 0.0
        %744 = vmatpush1.xpose.msra.mxu0 0.0
        %745 = vmatprep.subr.mxu0 0.0
        %746 = vmatpush1.xpose.msra.mxu0 0.0
        %747 = vmatprep.subr.mxu0 0.0
        %748 = vmatpush1.xpose.msra.mxu0 0.0
        %749 = vmatprep.subr.mxu0 0.0
        %750 = vmatpush1.xpose.msra.mxu0 0.0
        %751 = vmatprep.mubr.f32.mxu0 0.0
        %752 = vmatmul.mubr.f32.gmra.mrb[0].mxu0 %v679
        %v753 = vpop.f32.mrb[0].mxu0
        %v754 = vadd.f32 0.0, %v753
        %v755 = vpop.f32.mrb[0].mxu0
        %756 = vdwg.mxu0
        %v758 = vsel %vm530, %v677, 0
        %v761 = vsel %vm530, %v674, 0
        %v764 = vsel %vm530, %v675, 0
        %766 = vmatprep.subr.mxu0 0.0
        %767 = vmatpush1.xpose.msra.mxu0 %v761
        %768 = vmatprep.subr.mxu0 0.0
        %769 = vmatpush1.xpose.msra.mxu0 %v764
        %770 = vmatprep.subr.mxu0 0.0
        %771 = vmatpush1.xpose.msra.mxu0 0.0
        %772 = vmatprep.subr.mxu0 0.0
        %773 = vmatpush1.xpose.msra.mxu0 0.0
        %774 = vmatprep.subr.mxu0 0.0
        %775 = vmatpush1.xpose.msra.mxu0 0.0
        %776 = vmatprep.subr.mxu0 0.0
        %777 = vmatpush1.xpose.msra.mxu0 0.0
        %778 = vmatprep.subr.mxu0 0.0
        %779 = vmatpush1.xpose.msra.mxu0 0.0
        %780 = vmatprep.subr.mxu0 0.0
        %781 = vmatpush1.xpose.msra.mxu0 0.0
        %782 = vmatprep.subr.mxu0 0.0
        %783 = vmatpush1.xpose.msra.mxu0 0.0
        %784 = vmatprep.subr.mxu0 0.0
        %785 = vmatpush1.xpose.msra.mxu0 0.0
        %786 = vmatprep.subr.mxu0 0.0
        %787 = vmatpush1.xpose.msra.mxu0 0.0
        %788 = vmatprep.subr.mxu0 0.0
        %789 = vmatpush1.xpose.msra.mxu0 0.0
        %790 = vmatprep.subr.mxu0 0.0
        %791 = vmatpush1.xpose.msra.mxu0 0.0
        %792 = vmatprep.subr.mxu0 0.0
        %793 = vmatpush1.xpose.msra.mxu0 0.0
        %794 = vmatprep.subr.mxu0 0.0
        %795 = vmatpush1.xpose.msra.mxu0 0.0
        %796 = vmatprep.subr.mxu0 0.0
        %797 = vmatpush1.xpose.msra.mxu0 0.0
        %798 = vmatprep.subr.mxu0 0.0
        %799 = vmatpush1.xpose.msra.mxu0 0.0
        %800 = vmatprep.subr.mxu0 0.0
        %801 = vmatpush1.xpose.msra.mxu0 0.0
        %802 = vmatprep.subr.mxu0 0.0
        %803 = vmatpush1.xpose.msra.mxu0 0.0
        %804 = vmatprep.subr.mxu0 0.0
        %805 = vmatpush1.xpose.msra.mxu0 0.0
        %806 = vmatprep.subr.mxu0 0.0
        %807 = vmatpush1.xpose.msra.mxu0 0.0
        %808 = vmatprep.subr.mxu0 0.0
        %809 = vmatpush1.xpose.msra.mxu0 0.0
        %810 = vmatprep.subr.mxu0 0.0
        %811 = vmatpush1.xpose.msra.mxu0 0.0
        %812 = vmatprep.subr.mxu0 0.0
        %813 = vmatpush1.xpose.msra.mxu0 0.0
        %814 = vmatprep.subr.mxu0 0.0
        %815 = vmatpush1.xpose.msra.mxu0 0.0
        %816 = vmatprep.subr.mxu0 0.0
        %817 = vmatpush1.xpose.msra.mxu0 0.0
        %818 = vmatprep.subr.mxu0 0.0
        %819 = vmatpush1.xpose.msra.mxu0 0.0
        %820 = vmatprep.subr.mxu0 0.0
        %821 = vmatpush1.xpose.msra.mxu0 0.0
        %822 = vmatprep.subr.mxu0 0.0
        %823 = vmatpush1.xpose.msra.mxu0 0.0
        %824 = vmatprep.subr.mxu0 0.0
        %825 = vmatpush1.xpose.msra.mxu0 0.0
        %826 = vmatprep.subr.mxu0 0.0
        %827 = vmatpush1.xpose.msra.mxu0 0.0
        %828 = vmatprep.subr.mxu0 0.0
        %829 = vmatpush1.xpose.msra.mxu0 0.0
        %830 = vmatprep.mubr.f32.mxu0 0.0
        %831 = vmatmul.mubr.f32.gmra.mrb[0].mxu0 %v758
        %v832 = vpop.f32.mrb[0].mxu0
        %v833 = vadd.f32 0.0, %v832
        %v834 = vpop.f32.mrb[0].mxu0
        %835 = vdwg.mxu0
        %v836 = vld [vmem:[%s514] sm:$0x1]
        %v837 = vld [vmem:[%s514 + $0x1] sm:$0x1]
        %vm838 = vcmp.gt.f32.partialorder %v836, 0.0
        %vm839 = vcmp.gt.f32.partialorder %v837, 0.0
        %v840 = vsel %vm838, %v754, -1e+08
        %v841 = vsel %vm839, %v833, -1e+08
        %vm842 = vcmask 122880
        %v843 = vsel %vm842, %v840, -inf
        %844 = vmax.xlane.f32.xlu0 %v843
        %v845 = vpop.xlane.xlu0 %844
        %v846 = vsel %vm842, %v841, -inf
        %847 = vmax.xlane.f32.xlu0 %v846
        %v848 = vpop.xlane.xlu0 %847
        %v849 = vsub.f32 %v840, %v845
        %v850 = vsub.f32 %v841, %v848
        %v851 = vmul.f32 %v849, 1.442695
        %v852 = vpow.pop %v851
        %v853 = vmul.f32 %v850, 1.442695
        %v854 = vpow.pop %v853
        %v855 = vsel %vm842, %v852, 0.0
        %856 = vadd.xlane.f32.xlu0 %v855
        %v857 = vpop.xlane.xlu0 %856
        %v858 = vsel %vm842, %v854, 0.0
        %859 = vadd.xlane.f32.xlu0 %v858
        %v860 = vpop.xlane.xlu0 %859
        %v861 = vrcp.pop %v857
        %v862 = vmul.f32 %v852, %v861
        %v863 = vrcp.pop %v860
        %v864 = vmul.f32 %v854, %v863
        %865 = vst.msk [vmem:[%s503] sm:$0x1] %vm842, %v862
        %866 = vst.msk [vmem:[%s503 + $0x1] sm:$0x1] %vm842, %v864
        %vm867 = vcmask 130048
        %v869 = vsel %vm867, %v862, 0
        %871 = vmatprep.subr.mxu0 0.0
        %872 = vmatpush1.msra.mxu0 %v522
        %873 = vmatprep.subr.mxu0 0.0
        %874 = vmatpush1.msra.mxu0 %v523
        %875 = vmatprep.subr.mxu0 0.0
        %876 = vmatpush1.msra.mxu0 0.0
        %877 = vmatprep.subr.mxu0 0.0
        %878 = vmatpush1.msra.mxu0 0.0
        %879 = vmatprep.subr.mxu0 0.0
        %880 = vmatpush1.msra.mxu0 0.0
        %881 = vmatprep.subr.mxu0 0.0
        %882 = vmatpush1.msra.mxu0 0.0
        %883 = vmatprep.subr.mxu0 0.0
        %884 = vmatpush1.msra.mxu0 0.0
        %885 = vmatprep.subr.mxu0 0.0
        %886 = vmatpush1.msra.mxu0 0.0
        %887 = vmatprep.subr.mxu0 0.0
        %888 = vmatpush1.msra.mxu0 0.0
        %889 = vmatprep.subr.mxu0 0.0
        %890 = vmatpush1.msra.mxu0 0.0
        %891 = vmatprep.subr.mxu0 0.0
        %892 = vmatpush1.msra.mxu0 0.0
        %893 = vmatprep.subr.mxu0 0.0
        %894 = vmatpush1.msra.mxu0 0.0
        %895 = vmatprep.subr.mxu0 0.0
        %896 = vmatpush1.msra.mxu0 0.0
        %897 = vmatprep.subr.mxu0 0.0
        %898 = vmatpush1.msra.mxu0 0.0
        %899 = vmatprep.subr.mxu0 0.0
        %900 = vmatpush1.msra.mxu0 0.0
        %901 = vmatprep.subr.mxu0 0.0
        %902 = vmatpush1.msra.mxu0 0.0
        %903 = vmatprep.subr.mxu0 0.0
        %904 = vmatpush1.msra.mxu0 0.0
        %905 = vmatprep.subr.mxu0 0.0
        %906 = vmatpush1.msra.mxu0 0.0
        %907 = vmatprep.subr.mxu0 0.0
        %908 = vmatpush1.msra.mxu0 0.0
        %909 = vmatprep.subr.mxu0 0.0
        %910 = vmatpush1.msra.mxu0 0.0
        %911 = vmatprep.subr.mxu0 0.0
        %912 = vmatpush1.msra.mxu0 0.0
        %913 = vmatprep.subr.mxu0 0.0
        %914 = vmatpush1.msra.mxu0 0.0
        %915 = vmatprep.subr.mxu0 0.0
        %916 = vmatpush1.msra.mxu0 0.0
        %917 = vmatprep.subr.mxu0 0.0
        %918 = vmatpush1.msra.mxu0 0.0
        %919 = vmatprep.subr.mxu0 0.0
        %920 = vmatpush1.msra.mxu0 0.0
        %921 = vmatprep.subr.mxu0 0.0
        %922 = vmatpush1.msra.mxu0 0.0
        %923 = vmatprep.subr.mxu0 0.0
        %924 = vmatpush1.msra.mxu0 0.0
        %925 = vmatprep.subr.mxu0 0.0
        %926 = vmatpush1.msra.mxu0 0.0
        %927 = vmatprep.subr.mxu0 0.0
        %928 = vmatpush1.msra.mxu0 0.0
        %929 = vmatprep.subr.mxu0 0.0
        %930 = vmatpush1.msra.mxu0 0.0
        %931 = vmatprep.subr.mxu0 0.0
        %932 = vmatpush1.msra.mxu0 0.0
        %933 = vmatprep.subr.mxu0 0.0
        %934 = vmatpush1.msra.mxu0 0.0
        %935 = vmatprep.mubr.f32.mxu0 0.0
        %936 = vmatmul.mubr.f32.gmra.mrb[0].mxu0 %v869
        %v937 = vpop.f32.mrb[0].mxu0
        %v938 = vadd.f32 0.0, %v937
        %v939 = vpop.f32.mrb[0].mxu0
        %940 = vdwg.mxu0
        %v942 = vsel %vm867, %v864, 0
        %944 = vmatprep.subr.mxu0 0.0
        %945 = vmatpush1.msra.mxu0 %v524
        %946 = vmatprep.subr.mxu0 0.0
        %947 = vmatpush1.msra.mxu0 %v525
        %948 = vmatprep.subr.mxu0 0.0
        %949 = vmatpush1.msra.mxu0 0.0
        %950 = vmatprep.subr.mxu0 0.0
        %951 = vmatpush1.msra.mxu0 0.0
        %952 = vmatprep.subr.mxu0 0.0
        %953 = vmatpush1.msra.mxu0 0.0
        %954 = vmatprep.subr.mxu0 0.0
        %955 = vmatpush1.msra.mxu0 0.0
        %956 = vmatprep.subr.mxu0 0.0
        %957 = vmatpush1.msra.mxu0 0.0
        %958 = vmatprep.subr.mxu0 0.0
        %959 = vmatpush1.msra.mxu0 0.0
        %960 = vmatprep.subr.mxu0 0.0
        %961 = vmatpush1.msra.mxu0 0.0
        %962 = vmatprep.subr.mxu0 0.0
        %963 = vmatpush1.msra.mxu0 0.0
        %964 = vmatprep.subr.mxu0 0.0
        %965 = vmatpush1.msra.mxu0 0.0
        %966 = vmatprep.subr.mxu0 0.0
        %967 = vmatpush1.msra.mxu0 0.0
        %968 = vmatprep.subr.mxu0 0.0
        %969 = vmatpush1.msra.mxu0 0.0
        %970 = vmatprep.subr.mxu0 0.0
        %971 = vmatpush1.msra.mxu0 0.0
        %972 = vmatprep.subr.mxu0 0.0
        %973 = vmatpush1.msra.mxu0 0.0
        %974 = vmatprep.subr.mxu0 0.0
        %975 = vmatpush1.msra.mxu0 0.0
        %976 = vmatprep.subr.mxu0 0.0
        %977 = vmatpush1.msra.mxu0 0.0
        %978 = vmatprep.subr.mxu0 0.0
        %979 = vmatpush1.msra.mxu0 0.0
        %980 = vmatprep.subr.mxu0 0.0
        %981 = vmatpush1.msra.mxu0 0.0
        %982 = vmatprep.subr.mxu0 0.0
        %983 = vmatpush1.msra.mxu0 0.0
        %984 = vmatprep.subr.mxu0 0.0
        %985 = vmatpush1.msra.mxu0 0.0
        %986 = vmatprep.subr.mxu0 0.0
        %987 = vmatpush1.msra.mxu0 0.0
        %988 = vmatprep.subr.mxu0 0.0
        %989 = vmatpush1.msra.mxu0 0.0
        %990 = vmatprep.subr.mxu0 0.0
        %991 = vmatpush1.msra.mxu0 0.0
        %992 = vmatprep.subr.mxu0 0.0
        %993 = vmatpush1.msra.mxu0 0.0
        %994 = vmatprep.subr.mxu0 0.0
        %995 = vmatpush1.msra.mxu0 0.0
        %996 = vmatprep.subr.mxu0 0.0
        %997 = vmatpush1.msra.mxu0 0.0
        %998 = vmatprep.subr.mxu0 0.0
        %999 = vmatpush1.msra.mxu0 0.0
        %1000 = vmatprep.subr.mxu0 0.0
        %1001 = vmatpush1.msra.mxu0 0.0
        %1002 = vmatprep.subr.mxu0 0.0
        %1003 = vmatpush1.msra.mxu0 0.0
        %1004 = vmatprep.subr.mxu0 0.0
        %1005 = vmatpush1.msra.mxu0 0.0
        %1006 = vmatprep.subr.mxu0 0.0
        %1007 = vmatpush1.msra.mxu0 0.0
        %1008 = vmatprep.mubr.f32.mxu0 0.0
        %1009 = vmatmul.mubr.f32.gmra.mrb[0].mxu0 %v942
        %v1010 = vpop.f32.mrb[0].mxu0
        %v1011 = vadd.f32 0.0, %v1010
        %v1012 = vpop.f32.mrb[0].mxu0
        %1013 = vdwg.mxu0
        %vm1014 = vcmask 253952
        %1015 = vst.msk [vmem:[%s489] sm:$0x1] %vm1014, %v938
        %1016 = vst.msk [vmem:[%s489 + $0x1] sm:$0x1] %vm1014, %v1011
        %v1017 = vld [vmem:[#allocation8] sm:$0xff]
        %v1018 = vld [vmem:[#allocation8 + $0x8] sm:$0xff]
        %v1019 = vld [vmem:[#allocation8 + $0x10] sm:$0xff]
        %v1020 = vld [vmem:[#allocation8 + $0x18] sm:$0xff]
        %v1022 = vsel %vm530, %v520, 0
        %v1025 = vsel %vm530, %v521, 0
        %1027 = vmatprep.subr.mxu0 0.0
        %1028 = vmatpush1.msra.mxu0 %v1017
        %1029 = vmatprep.subr.mxu0 0.0
        %1030 = vmatpush1.msra.mxu0 %v1018
        %1031 = vmatprep.subr.mxu0 0.0
        %1032 = vmatpush1.msra.mxu0 %v1019
        %1033 = vmatprep.subr.mxu0 0.0
        %1034 = vmatpush1.msra.mxu0 %v1020
        %1035 = vmatprep.subr.mxu0 0.0
        %1036 = vmatpush1.msra.mxu0 0.0
        %1037 = vmatprep.subr.mxu0 0.0
        %1038 = vmatpush1.msra.mxu0 0.0
        %1039 = vmatprep.subr.mxu0 0.0
        %1040 = vmatpush1.msra.mxu0 0.0
        %1041 = vmatprep.subr.mxu0 0.0
        %1042 = vmatpush1.msra.mxu0 0.0
        %1043 = vmatprep.subr.mxu0 0.0
        %1044 = vmatpush1.msra.mxu0 0.0
        %1045 = vmatprep.subr.mxu0 0.0
        %1046 = vmatpush1.msra.mxu0 0.0
        %1047 = vmatprep.subr.mxu0 0.0
        %1048 = vmatpush1.msra.mxu0 0.0
        %1049 = vmatprep.subr.mxu0 0.0
        %1050 = vmatpush1.msra.mxu0 0.0
        %1051 = vmatprep.subr.mxu0 0.0
        %1052 = vmatpush1.msra.mxu0 0.0
        %1053 = vmatprep.subr.mxu0 0.0
        %1054 = vmatpush1.msra.mxu0 0.0
        %1055 = vmatprep.subr.mxu0 0.0
        %1056 = vmatpush1.msra.mxu0 0.0
        %1057 = vmatprep.subr.mxu0 0.0
        %1058 = vmatpush1.msra.mxu0 0.0
        %1059 = vmatprep.subr.mxu0 0.0
        %1060 = vmatpush1.msra.mxu0 0.0
        %1061 = vmatprep.subr.mxu0 0.0
        %1062 = vmatpush1.msra.mxu0 0.0
        %1063 = vmatprep.subr.mxu0 0.0
        %1064 = vmatpush1.msra.mxu0 0.0
        %1065 = vmatprep.subr.mxu0 0.0
        %1066 = vmatpush1.msra.mxu0 0.0
        %1067 = vmatprep.subr.mxu0 0.0
        %1068 = vmatpush1.msra.mxu0 0.0
        %1069 = vmatprep.subr.mxu0 0.0
        %1070 = vmatpush1.msra.mxu0 0.0
        %1071 = vmatprep.subr.mxu0 0.0
        %1072 = vmatpush1.msra.mxu0 0.0
        %1073 = vmatprep.subr.mxu0 0.0
        %1074 = vmatpush1.msra.mxu0 0.0
        %1075 = vmatprep.subr.mxu0 0.0
        %1076 = vmatpush1.msra.mxu0 0.0
        %1077 = vmatprep.subr.mxu0 0.0
        %1078 = vmatpush1.msra.mxu0 0.0
        %1079 = vmatprep.subr.mxu0 0.0
        %1080 = vmatpush1.msra.mxu0 0.0
        %1081 = vmatprep.subr.mxu0 0.0
        %1082 = vmatpush1.msra.mxu0 0.0
        %1083 = vmatprep.subr.mxu0 0.0
        %1084 = vmatpush1.msra.mxu0 0.0
        %1085 = vmatprep.subr.mxu0 0.0
        %1086 = vmatpush1.msra.mxu0 0.0
        %1087 = vmatprep.subr.mxu0 0.0
        %1088 = vmatpush1.msra.mxu0 0.0
        %1089 = vmatprep.subr.mxu0 0.0
        %1090 = vmatpush1.msra.mxu0 0.0
        %1091 = vmatprep.mubr.f32.mxu0 0.0
        %1092 = vmatmul.mubr.f32.gmra.mrb[0].mxu0 %v1022
        %v1093 = vpop.f32.mrb[0].mxu0
        %v1094 = vadd.f32 0.0, %v1093
        %v1095 = vpop.f32.mrb[0].mxu0
        %1096 = vmatprep.mubr.f32.mxu0 0.0
        %1097 = vmatmul.mubr.f32.gmra.mrb[0].mxu0 %v1025
        %v1098 = vpop.f32.mrb[0].mxu0
        %v1099 = vadd.f32 0.0, %v1098
        %v1100 = vpop.f32.mrb[0].mxu0
        %1101 = vdwg.mxu0
        %v1103 = vsel %vm530, %v1094, 0
        %1105 = vmatprep.subr.mxu0 0.0
        %1106 = vmatpush1.xpose.msra.mxu0 %v1103
        %1107 = vmatprep.subr.mxu0 0.0
        %1108 = vmatpush1.xpose.msra.mxu0 0.0
        %1109 = vmatprep.subr.mxu0 0.0
        %1110 = vmatpush1.xpose.msra.mxu0 0.0
        %1111 = vmatprep.subr.mxu0 0.0
        %1112 = vmatpush1.xpose.msra.mxu0 0.0
        %1113 = vmatprep.subr.mxu0 0.0
        %1114 = vmatpush1.xpose.msra.mxu0 0.0
        %1115 = vmatprep.subr.mxu0 0.0
        %1116 = vmatpush1.xpose.msra.mxu0 0.0
        %1117 = vmatprep.subr.mxu0 0.0
        %1118 = vmatpush1.xpose.msra.mxu0 0.0
        %1119 = vmatprep.subr.mxu0 0.0
        %1120 = vmatpush1.xpose.msra.mxu0 0.0
        %1121 = vmatprep.subr.mxu0 0.0
        %1122 = vmatpush1.xpose.msra.mxu0 0.0
        %1123 = vmatprep.subr.mxu0 0.0
        %1124 = vmatpush1.xpose.msra.mxu0 0.0
        %1125 = vmatprep.subr.mxu0 0.0
        %1126 = vmatpush1.xpose.msra.mxu0 0.0
        %1127 = vmatprep.subr.mxu0 0.0
        %1128 = vmatpush1.xpose.msra.mxu0 0.0
        %1129 = vmatprep.subr.mxu0 0.0
        %1130 = vmatpush1.xpose.msra.mxu0 0.0
        %1131 = vmatprep.subr.mxu0 0.0
        %1132 = vmatpush1.xpose.msra.mxu0 0.0
        %1133 = vmatprep.subr.mxu0 0.0
        %1134 = vmatpush1.xpose.msra.mxu0 0.0
        %1135 = vmatprep.subr.mxu0 0.0
        %1136 = vmatpush1.xpose.msra.mxu0 0.0
        %1137 = vmatprep.subr.mxu0 0.0
        %1138 = vmatpush1.xpose.msra.mxu0 0.0
        %1139 = vmatprep.subr.mxu0 0.0
        %1140 = vmatpush1.xpose.msra.mxu0 0.0
        %1141 = vmatprep.subr.mxu0 0.0
        %1142 = vmatpush1.xpose.msra.mxu0 0.0
        %1143 = vmatprep.subr.mxu0 0.0
        %1144 = vmatpush1.xpose.msra.mxu0 0.0
        %1145 = vmatprep.subr.mxu0 0.0
        %1146 = vmatpush1.xpose.msra.mxu0 0.0
        %1147 = vmatprep.subr.mxu0 0.0
        %1148 = vmatpush1.xpose.msra.mxu0 0.0
        %1149 = vmatprep.subr.mxu0 0.0
        %1150 = vmatpush1.xpose.msra.mxu0 0.0
        %1151 = vmatprep.subr.mxu0 0.0
        %1152 = vmatpush1.xpose.msra.mxu0 0.0
        %1153 = vmatprep.subr.mxu0 0.0
        %1154 = vmatpush1.xpose.msra.mxu0 0.0
        %1155 = vmatprep.subr.mxu0 0.0
        %1156 = vmatpush1.xpose.msra.mxu0 0.0
        %1157 = vmatprep.subr.mxu0 0.0
        %1158 = vmatpush1.xpose.msra.mxu0 0.0
        %1159 = vmatprep.subr.mxu0 0.0
        %1160 = vmatpush1.xpose.msra.mxu0 0.0
        %1161 = vmatprep.subr.mxu0 0.0
        %1162 = vmatpush1.xpose.msra.mxu0 0.0
        %1163 = vmatprep.subr.mxu0 0.0
        %1164 = vmatpush1.xpose.msra.mxu0 0.0
        %1165 = vmatprep.subr.mxu0 0.0
        %1166 = vmatpush1.xpose.msra.mxu0 0.0
        %1167 = vmatprep.subr.mxu0 0.0
        %1168 = vmatpush1.xpose.msra.mxu0 0.0
        %1169 = vmatprep.mubr.f32.mxu0 0.0
        %1170 = vmatmul.mubr.f32.gmra.mrb[0].mxu0 %v532
        %v1171 = vpop.f32.mrb[0].mxu0
        %v1172 = vadd.f32 0.0, %v1171
        %v1173 = vpop.f32.mrb[0].mxu0
        %1174 = vmatprep.mubr.f32.mxu0 0.0
        %1175 = vmatmul.mubr.f32.gmra.mrb[0].mxu0 %v535
        %v1176 = vpop.f32.mrb[0].mxu0
        %v1177 = vadd.f32 0.0, %v1176
        %v1178 = vpop.f32.mrb[0].mxu0
        %1179 = vdwg.mxu0
        %v1181 = vsel %vm530, %v1099, 0
        %1183 = vmatprep.subr.mxu0 0.0
        %1184 = vmatpush1.xpose.msra.mxu0 %v1181
        %1185 = vmatprep.subr.mxu0 0.0
        %1186 = vmatpush1.xpose.msra.mxu0 0.0
        %1187 = vmatprep.subr.mxu0 0.0
        %1188 = vmatpush1.xpose.msra.mxu0 0.0
        %1189 = vmatprep.subr.mxu0 0.0
        %1190 = vmatpush1.xpose.msra.mxu0 0.0
        %1191 = vmatprep.subr.mxu0 0.0
        %1192 = vmatpush1.xpose.msra.mxu0 0.0
        %1193 = vmatprep.subr.mxu0 0.0
        %1194 = vmatpush1.xpose.msra.mxu0 0.0
        %1195 = vmatprep.subr.mxu0 0.0
        %1196 = vmatpush1.xpose.msra.mxu0 0.0
        %1197 = vmatprep.subr.mxu0 0.0
        %1198 = vmatpush1.xpose.msra.mxu0 0.0
        %1199 = vmatprep.subr.mxu0 0.0
        %1200 = vmatpush1.xpose.msra.mxu0 0.0
        %1201 = vmatprep.subr.mxu0 0.0
        %1202 = vmatpush1.xpose.msra.mxu0 0.0
        %1203 = vmatprep.subr.mxu0 0.0
        %1204 = vmatpush1.xpose.msra.mxu0 0.0
        %1205 = vmatprep.subr.mxu0 0.0
        %1206 = vmatpush1.xpose.msra.mxu0 0.0
        %1207 = vmatprep.subr.mxu0 0.0
        %1208 = vmatpush1.xpose.msra.mxu0 0.0
        %1209 = vmatprep.subr.mxu0 0.0
        %1210 = vmatpush1.xpose.msra.mxu0 0.0
        %1211 = vmatprep.subr.mxu0 0.0
        %1212 = vmatpush1.xpose.msra.mxu0 0.0
        %1213 = vmatprep.subr.mxu0 0.0
        %1214 = vmatpush1.xpose.msra.mxu0 0.0
        %1215 = vmatprep.subr.mxu0 0.0
        %1216 = vmatpush1.xpose.msra.mxu0 0.0
        %1217 = vmatprep.subr.mxu0 0.0
        %1218 = vmatpush1.xpose.msra.mxu0 0.0
        %1219 = vmatprep.subr.mxu0 0.0
        %1220 = vmatpush1.xpose.msra.mxu0 0.0
        %1221 = vmatprep.subr.mxu0 0.0
        %1222 = vmatpush1.xpose.msra.mxu0 0.0
        %1223 = vmatprep.subr.mxu0 0.0
        %1224 = vmatpush1.xpose.msra.mxu0 0.0
        %1225 = vmatprep.subr.mxu0 0.0
        %1226 = vmatpush1.xpose.msra.mxu0 0.0
        %1227 = vmatprep.subr.mxu0 0.0
        %1228 = vmatpush1.xpose.msra.mxu0 0.0
        %1229 = vmatprep.subr.mxu0 0.0
        %1230 = vmatpush1.xpose.msra.mxu0 0.0
        %1231 = vmatprep.subr.mxu0 0.0
        %1232 = vmatpush1.xpose.msra.mxu0 0.0
        %1233 = vmatprep.subr.mxu0 0.0
        %1234 = vmatpush1.xpose.msra.mxu0 0.0
        %1235 = vmatprep.subr.mxu0 0.0
        %1236 = vmatpush1.xpose.msra.mxu0 0.0
        %1237 = vmatprep.subr.mxu0 0.0
        %1238 = vmatpush1.xpose.msra.mxu0 0.0
        %1239 = vmatprep.subr.mxu0 0.0
        %1240 = vmatpush1.xpose.msra.mxu0 0.0
        %1241 = vmatprep.subr.mxu0 0.0
        %1242 = vmatpush1.xpose.msra.mxu0 0.0
        %1243 = vmatprep.subr.mxu0 0.0
        %1244 = vmatpush1.xpose.msra.mxu0 0.0
        %1245 = vmatprep.subr.mxu0 0.0
        %1246 = vmatpush1.xpose.msra.mxu0 0.0
        %1247 = vmatprep.mubr.f32.mxu0 0.0
        %1248 = vmatmul.mubr.f32.gmra.mrb[0].mxu0 %v538
        %v1249 = vpop.f32.mrb[0].mxu0
        %v1250 = vadd.f32 0.0, %v1249
        %v1251 = vpop.f32.mrb[0].mxu0
        %1252 = vmatprep.mubr.f32.mxu0 0.0
        %1253 = vmatmul.mubr.f32.gmra.mrb[0].mxu0 %v541
        %v1254 = vpop.f32.mrb[0].mxu0
        %v1255 = vadd.f32 0.0, %v1254
        %v1256 = vpop.f32.mrb[0].mxu0
        %1257 = vdwg.mxu0
        %vm1258 = vcmask 64512
        %v1259 = vsel %vm1258, %v1172, -inf
        %v1260 = vsel %vm1258, %v1177, -inf
        %v1261 = vmax.f32 %v1259, %v1260
        %v1262 = vrot.slane %v1261, 4
        %v1263 = vmax.f32 %v1261, %v1262
        %v1264 = vrot.slane %v1263, 2
        %v1265 = vmax.f32 %v1263, %v1264
        %v1266 = vrot.slane %v1265, 1
        %v1267 = vmax.f32 %v1265, %v1266
        %v1268 = vsel %vm1258, %v1250, -inf
        %v1269 = vsel %vm1258, %v1255, -inf
        %v1270 = vmax.f32 %v1268, %v1269
        %v1271 = vrot.slane %v1270, 4
        %v1272 = vmax.f32 %v1270, %v1271
        %v1273 = vrot.slane %v1272, 2
        %v1274 = vmax.f32 %v1272, %v1273
        %v1275 = vrot.slane %v1274, 1
        %v1276 = vmax.f32 %v1274, %v1275
        %v1277 = vld [vmem:[%s509] sm:$0x1]
        %v1278 = vld [vmem:[%s509 + $0x1] sm:$0x1]
        %vm1279 = vcmp.gt.f32.partialorder %v1277, 0.0
        %vm1280 = vcmp.gt.f32.partialorder %v1278, 0.0
        %v1281 = vsel %vm1279, %v1267, -1e+08
        %v1282 = vsel %vm1280, %v1276, -1e+08
        %vm1283 = vcmask 57344
        %v1284 = vsel %vm1283, %v1281, -inf
        %1285 = vmax.xlane.f32.xlu0 %v1284
        %v1286 = vpop.xlane.xlu0 %1285
        %v1287 = vsel %vm1283, %v1282, -inf
        %1288 = vmax.xlane.f32.xlu0 %v1287
        %v1289 = vpop.xlane.xlu0 %1288
        %v1290 = vsub.f32 %v1281, %v1286
        %v1291 = vsub.f32 %v1282, %v1289
        %v1292 = vmul.f32 %v1290, 1.442695
        %v1293 = vpow.pop %v1292
        %v1294 = vmul.f32 %v1291, 1.442695
        %v1295 = vpow.pop %v1294
        %v1296 = vsel %vm1283, %v1293, 0.0
        %1297 = vadd.xlane.f32.xlu0 %v1296
        %v1298 = vpop.xlane.xlu0 %1297
        %v1299 = vsel %vm1283, %v1295, 0.0
        %1300 = vadd.xlane.f32.xlu0 %v1299
        %v1301 = vpop.xlane.xlu0 %1300
        %v1302 = vrcp.pop %v1298
        %v1303 = vmul.f32 %v1293, %v1302
        %v1304 = vrcp.pop %v1301
        %v1305 = vmul.f32 %v1295, %v1304
        %1306 = vst.msk [vmem:[%s496] sm:$0x1] %vm1283, %v1303
        %1307 = vst.msk [vmem:[%s496 + $0x1] sm:$0x1] %vm1283, %v1305
        %v1309 = vsel %vm1258, %v1303, 0
        %1311 = vmatprep.subr.mxu0 0.0
        %1312 = vmatpush1.msra.mxu0 %v520
        %1313 = vmatprep.subr.mxu0 0.0
        %1314 = vmatpush1.msra.mxu0 0.0
        %1315 = vmatprep.subr.mxu0 0.0
        %1316 = vmatpush1.msra.mxu0 0.0
        %1317 = vmatprep.subr.mxu0 0.0
        %1318 = vmatpush1.msra.mxu0 0.0
        %1319 = vmatprep.subr.mxu0 0.0
        %1320 = vmatpush1.msra.mxu0 0.0
        %1321 = vmatprep.subr.mxu0 0.0
        %1322 = vmatpush1.msra.mxu0 0.0
        %1323 = vmatprep.subr.mxu0 0.0
        %1324 = vmatpush1.msra.mxu0 0.0
        %1325 = vmatprep.subr.mxu0 0.0
        %1326 = vmatpush1.msra.mxu0 0.0
        %1327 = vmatprep.subr.mxu0 0.0
        %1328 = vmatpush1.msra.mxu0 0.0
        %1329 = vmatprep.subr.mxu0 0.0
        %1330 = vmatpush1.msra.mxu0 0.0
        %1331 = vmatprep.subr.mxu0 0.0
        %1332 = vmatpush1.msra.mxu0 0.0
        %1333 = vmatprep.subr.mxu0 0.0
        %1334 = vmatpush1.msra.mxu0 0.0
        %1335 = vmatprep.subr.mxu0 0.0
        %1336 = vmatpush1.msra.mxu0 0.0
        %1337 = vmatprep.subr.mxu0 0.0
        %1338 = vmatpush1.msra.mxu0 0.0
        %1339 = vmatprep.subr.mxu0 0.0
        %1340 = vmatpush1.msra.mxu0 0.0
        %1341 = vmatprep.subr.mxu0 0.0
        %1342 = vmatpush1.msra.mxu0 0.0
        %1343 = vmatprep.subr.mxu0 0.0
        %1344 = vmatpush1.msra.mxu0 0.0
        %1345 = vmatprep.subr.mxu0 0.0
        %1346 = vmatpush1.msra.mxu0 0.0
        %1347 = vmatprep.subr.mxu0 0.0
        %1348 = vmatpush1.msra.mxu0 0.0
        %1349 = vmatprep.subr.mxu0 0.0
        %1350 = vmatpush1.msra.mxu0 0.0
        %1351 = vmatprep.subr.mxu0 0.0
        %1352 = vmatpush1.msra.mxu0 0.0
        %1353 = vmatprep.subr.mxu0 0.0
        %1354 = vmatpush1.msra.mxu0 0.0
        %1355 = vmatprep.subr.mxu0 0.0
        %1356 = vmatpush1.msra.mxu0 0.0
        %1357 = vmatprep.subr.mxu0 0.0
        %1358 = vmatpush1.msra.mxu0 0.0
        %1359 = vmatprep.subr.mxu0 0.0
        %1360 = vmatpush1.msra.mxu0 0.0
        %1361 = vmatprep.subr.mxu0 0.0
        %1362 = vmatpush1.msra.mxu0 0.0
        %1363 = vmatprep.subr.mxu0 0.0
        %1364 = vmatpush1.msra.mxu0 0.0
        %1365 = vmatprep.subr.mxu0 0.0
        %1366 = vmatpush1.msra.mxu0 0.0
        %1367 = vmatprep.subr.mxu0 0.0
        %1368 = vmatpush1.msra.mxu0 0.0
        %1369 = vmatprep.subr.mxu0 0.0
        %1370 = vmatpush1.msra.mxu0 0.0
        %1371 = vmatprep.subr.mxu0 0.0
        %1372 = vmatpush1.msra.mxu0 0.0
        %1373 = vmatprep.subr.mxu0 0.0
        %1374 = vmatpush1.msra.mxu0 0.0
        %1375 = vmatprep.mubr.f32.mxu0 0.0
        %1376 = vmatmul.mubr.f32.gmra.mrb[0].mxu0 %v1309
        %v1377 = vpop.f32.mrb[0].mxu0
        %v1378 = vadd.f32 0.0, %v1377
        %v1379 = vpop.f32.mrb[0].mxu0
        %1380 = vdwg.mxu0
        %v1382 = vsel %vm1258, %v1305, 0
        %1384 = vmatprep.subr.mxu0 0.0
        %1385 = vmatpush1.msra.mxu0 %v521
        %1386 = vmatprep.subr.mxu0 0.0
        %1387 = vmatpush1.msra.mxu0 0.0
        %1388 = vmatprep.subr.mxu0 0.0
        %1389 = vmatpush1.msra.mxu0 0.0
        %1390 = vmatprep.subr.mxu0 0.0
        %1391 = vmatpush1.msra.mxu0 0.0
        %1392 = vmatprep.subr.mxu0 0.0
        %1393 = vmatpush1.msra.mxu0 0.0
        %1394 = vmatprep.subr.mxu0 0.0
        %1395 = vmatpush1.msra.mxu0 0.0
        %1396 = vmatprep.subr.mxu0 0.0
        %1397 = vmatpush1.msra.mxu0 0.0
        %1398 = vmatprep.subr.mxu0 0.0
        %1399 = vmatpush1.msra.mxu0 0.0
        %1400 = vmatprep.subr.mxu0 0.0
        %1401 = vmatpush1.msra.mxu0 0.0
        %1402 = vmatprep.subr.mxu0 0.0
        %1403 = vmatpush1.msra.mxu0 0.0
        %1404 = vmatprep.subr.mxu0 0.0
        %1405 = vmatpush1.msra.mxu0 0.0
        %1406 = vmatprep.subr.mxu0 0.0
        %1407 = vmatpush1.msra.mxu0 0.0
        %1408 = vmatprep.subr.mxu0 0.0
        %1409 = vmatpush1.msra.mxu0 0.0
        %1410 = vmatprep.subr.mxu0 0.0
        %1411 = vmatpush1.msra.mxu0 0.0
        %1412 = vmatprep.subr.mxu0 0.0
        %1413 = vmatpush1.msra.mxu0 0.0
        %1414 = vmatprep.subr.mxu0 0.0
        %1415 = vmatpush1.msra.mxu0 0.0
        %1416 = vmatprep.subr.mxu0 0.0
        %1417 = vmatpush1.msra.mxu0 0.0
        %1418 = vmatprep.subr.mxu0 0.0
        %1419 = vmatpush1.msra.mxu0 0.0
        %1420 = vmatprep.subr.mxu0 0.0
        %1421 = vmatpush1.msra.mxu0 0.0
        %1422 = vmatprep.subr.mxu0 0.0
        %1423 = vmatpush1.msra.mxu0 0.0
        %1424 = vmatprep.subr.mxu0 0.0
        %1425 = vmatpush1.msra.mxu0 0.0
        %1426 = vmatprep.subr.mxu0 0.0
        %1427 = vmatpush1.msra.mxu0 0.0
        %1428 = vmatprep.subr.mxu0 0.0
        %1429 = vmatpush1.msra.mxu0 0.0
        %1430 = vmatprep.subr.mxu0 0.0
        %1431 = vmatpush1.msra.mxu0 0.0
        %1432 = vmatprep.subr.mxu0 0.0
        %1433 = vmatpush1.msra.mxu0 0.0
        %1434 = vmatprep.subr.mxu0 0.0
        %1435 = vmatpush1.msra.mxu0 0.0
        %1436 = vmatprep.subr.mxu0 0.0
        %1437 = vmatpush1.msra.mxu0 0.0
        %1438 = vmatprep.subr.mxu0 0.0
        %1439 = vmatpush1.msra.mxu0 0.0
        %1440 = vmatprep.subr.mxu0 0.0
        %1441 = vmatpush1.msra.mxu0 0.0
        %1442 = vmatprep.subr.mxu0 0.0
        %1443 = vmatpush1.msra.mxu0 0.0
        %1444 = vmatprep.subr.mxu0 0.0
        %1445 = vmatpush1.msra.mxu0 0.0
        %1446 = vmatprep.subr.mxu0 0.0
        %1447 = vmatpush1.msra.mxu0 0.0
        %1448 = vmatprep.mubr.f32.mxu0 0.0
        %1449 = vmatmul.mubr.f32.gmra.mrb[0].mxu0 %v1382
        %v1450 = vpop.f32.mrb[0].mxu0
        %v1451 = vadd.f32 0.0, %v1450
        %v1452 = vpop.f32.mrb[0].mxu0
        %1453 = vdwg.mxu0
        %1454 = vst.msk [vmem:[%s482] sm:$0x1] %vm1014, %v1378
        %1455 = vst.msk [vmem:[%s482 + $0x1] sm:$0x1] %vm1014, %v1451
        %s1456 = sand.u32 %s213, 1
        %s1457 = scalar_lea.sflag [#allocation4], %s1456
        %s1458 = sand.u32 %s213, 1
        %s1459 = smul.addr %s1458, 2
        %s1460 = scalar_lea.vmem [#allocation10], %s1459
        %s1461 = sand.u32 %s38, 1
        %s1462 = scalar_lea.sflag [#allocation12], %s1461
        %s1463 = sand.u32 %s239, 1
        %s1464 = smul.addr %s1463, 2
        %s1465 = scalar_lea.vmem [#allocation11], %s1464
        %s1466 = sand.u32 %s38, 1
        %s1467 = scalar_lea.sflag [#allocation12], %s1466
        %s1468 = sand.u32 %s265, 1
        %s1469 = smul.addr %s1468, 2
        %s1470 = scalar_lea.vmem [#allocation13], %s1469
        %s1471 = sand.u32 %s291, 1
        %s1472 = scalar_lea.sflag [#allocation15], %s1471
        %s1473 = sand.u32 %s291, 1
        %s1474 = smul.addr %s1473, 2
        %s1475 = scalar_lea.vmem [#allocation14], %s1474
        // Predicated region
        $region65: #{tpu_custom_call.1} parent=47 // pred_check
          %p1476 = pneg %p223
        $region66: #{tpu_custom_call.1} parent=47 // pred_check_branch
          %1478 = sbr.rel (%p1476) target = $region68
        $region67: #{tpu_custom_call.1} parent=47 // pred_region
          %s1479 = smul.u32 2, %s38
          %s1481 = ssub.s32 32, 32
          %1482 = vsyncadd %s1457, %s1481
          %s1483 = smul.addr %s1479, 16
          %s1484 = scalar_lea.hbm %s7, %s1483
          %s1485 = sshll.u32 %s1460, 4
          %s1486 = int_to_ptr.vmem [resolvable:$true] %s1485
          %1491 = dma.vmem_to_hbm [thread:$0]  %s1486, 32, %s1484, %s1457, 16, 16, 1
        $region68: #{tpu_custom_call.1} parent=47 // pred_fallthru
          _
        // Predicated region
        $region69: #{tpu_custom_call.1} parent=47 // pred_check
          %p1492 = pneg %p249
        $region70: #{tpu_custom_call.1} parent=47 // pred_check_branch
          %1494 = sbr.rel (%p1492) target = $region72
        $region71: #{tpu_custom_call.1} parent=47 // pred_region
          %s1495 = smul.u32 2, %s38
          %s1497 = ssub.s32 32, 32
          %1498 = vsyncadd %s1462, %s1497
          %s1499 = smul.addr %s1495, 16
          %s1500 = scalar_lea.hbm %s8, %s1499
          %s1501 = sshll.u32 %s1465, 4
          %s1502 = int_to_ptr.vmem [resolvable:$true] %s1501
          %1507 = dma.vmem_to_hbm [thread:$0]  %s1502, 32, %s1500, %s1462, 16, 16, 1
        $region72: #{tpu_custom_call.1} parent=47 // pred_fallthru
          _
        // Predicated region
        $region73: #{tpu_custom_call.1} parent=47 // pred_check
          %p1508 = pneg %p275
        $region74: #{tpu_custom_call.1} parent=47 // pred_check_branch
          %1510 = sbr.rel (%p1508) target = $region76
        $region75: #{tpu_custom_call.1} parent=47 // pred_region
          %s1511 = smul.u32 2, %s38
          %s1513 = ssub.s32 32, 32
          %1514 = vsyncadd %s1467, %s1513
          %s1515 = smul.addr %s1511, 16
          %s1516 = scalar_lea.hbm %s9, %s1515
          %s1517 = sshll.u32 %s1470, 4
          %s1518 = int_to_ptr.vmem [resolvable:$true] %s1517
          %1523 = dma.vmem_to_hbm [thread:$0]  %s1518, 32, %s1516, %s1467, 16, 16, 1
        $region76: #{tpu_custom_call.1} parent=47 // pred_fallthru
          _
        // Predicated region
        $region77: #{tpu_custom_call.1} parent=47 // pred_check
          %p1524 = pneg %p301
        $region78: #{tpu_custom_call.1} parent=47 // pred_check_branch
          %1526 = sbr.rel (%p1524) target = $region80
        $region79: #{tpu_custom_call.1} parent=47 // pred_region
          %s1527 = smul.u32 2, %s38
          %s1529 = ssub.s32 32, 32
          %1530 = vsyncadd %s1472, %s1529
          %s1531 = smul.addr %s1527, 16
          %s1532 = scalar_lea.hbm %s10, %s1531
          %s1533 = sshll.u32 %s1475, 4
          %s1534 = int_to_ptr.vmem [resolvable:$true] %s1533
          %1539 = dma.vmem_to_hbm [thread:$0]  %s1534, 32, %s1532, %s1472, 16, 16, 1
        $region80: #{tpu_custom_call.1} parent=47 // pred_fallthru
          _
      $region48: #{tpu_custom_call.1} parent=5 // pred_fallthru
        _
      %p1540 = scmp.le.s32.totalorder 2, %s33
      // Predicated region
      $region81: #{tpu_custom_call.1} parent=5 // pred_check
        %p1541 = pneg %p1540
      $region82: #{tpu_custom_call.1} parent=5 // pred_check_branch
        %1543 = sbr.rel (%p1541) target = $region84
      $region83: #{tpu_custom_call.1} parent=5 // pred_region
        %s1544 = ssub.s32 %s33, 2
        // Predicated region
        $region85: #{tpu_custom_call.1} parent=83 // pred_check
          %p1545 = pneg %p229
        $region86: #{tpu_custom_call.1} parent=83 // pred_check_branch
          %1547 = sbr.rel (%p1545) target = $region88
        $region87: #{tpu_custom_call.1} parent=83 // pred_region
          %s1548 = sand.u32 %s214, 1
          %s1549 = scalar_lea.sflag [#allocation4], %s1548
          %s1550 = sand.u32 %s214, 1
          %s1551 = smul.addr %s1550, 2
          %s1552 = scalar_lea.vmem [#allocation10], %s1551
          %1553 = dma.done %s1549, 32
        $region88: #{tpu_custom_call.1} parent=83 // pred_fallthru
          _
        // Predicated region
        $region89: #{tpu_custom_call.1} parent=83 // pred_check
          %p1554 = pneg %p255
        $region90: #{tpu_custom_call.1} parent=83 // pred_check_branch
          %1556 = sbr.rel (%p1554) target = $region92
        $region91: #{tpu_custom_call.1} parent=83 // pred_region
          %s1557 = sand.u32 %s39, 1
          %s1558 = scalar_lea.sflag [#allocation12], %s1557
          %s1559 = sand.u32 %s240, 1
          %s1560 = smul.addr %s1559, 2
          %s1561 = scalar_lea.vmem [#allocation11], %s1560
          %1562 = dma.done %s1558, 32
        $region92: #{tpu_custom_call.1} parent=83 // pred_fallthru
          _
        // Predicated region
        $region93: #{tpu_custom_call.1} parent=83 // pred_check
          %p1563 = pneg %p281
        $region94: #{tpu_custom_call.1} parent=83 // pred_check_branch
          %1565 = sbr.rel (%p1563) target = $region96
        $region95: #{tpu_custom_call.1} parent=83 // pred_region
          %s1566 = sand.u32 %s39, 1
          %s1567 = scalar_lea.sflag [#allocation12], %s1566
          %s1568 = sand.u32 %s266, 1
          %s1569 = smul.addr %s1568, 2
          %s1570 = scalar_lea.vmem [#allocation13], %s1569
          %1571 = dma.done %s1567, 32
        $region96: #{tpu_custom_call.1} parent=83 // pred_fallthru
          _
        // Predicated region
        $region97: #{tpu_custom_call.1} parent=83 // pred_check
          %p1572 = pneg %p307
        $region98: #{tpu_custom_call.1} parent=83 // pred_check_branch
          %1574 = sbr.rel (%p1572) target = $region100
        $region99: #{tpu_custom_call.1} parent=83 // pred_region
          %s1575 = sand.u32 %s292, 1
          %s1576 = scalar_lea.sflag [#allocation15], %s1575
          %s1577 = sand.u32 %s292, 1
          %s1578 = smul.addr %s1577, 2
          %s1579 = scalar_lea.vmem [#allocation14], %s1578
          %1580 = dma.done %s1576, 32
        $region100: #{tpu_custom_call.1} parent=83 // pred_fallthru
          _
      $region84: #{tpu_custom_call.1} parent=5 // pred_fallthru
        _
    $region6: #{tpu_custom_call.1} parent=1 // loop_footer
      %s37 = sadd.s32 1, %s33
    $region7: #{tpu_custom_call.1} parent=1 // loop_footer_branch
      %32 = sbr.rel target = $region3
    $region8: #{tpu_custom_call.1} parent=1 // loop_exit
      _
    %1581 = vsyncpa [#allocation3], 1
    %s1582 = scalar_lea.sflag [#allocation3], 1
    %1583 = vsyncpa %s1582, 1
    %1584 = vsyncpa [#allocation6], 1
    %s1585 = scalar_lea.sflag [#allocation6], 1
    %1586 = vsyncpa %s1585, 1
    %1587 = vsyncpa [#allocation9], 1
    %1588 = vsyncpa [#allocation4], 1
    %s1589 = scalar_lea.sflag [#allocation4], 1
    %1590 = vsyncpa %s1589, 1
    %1591 = vsyncpa [#allocation12], 1
    %s1592 = scalar_lea.sflag [#allocation12], 1
    %1593 = vsyncpa %s1592, 1
    %1594 = vsyncpa [#allocation15], 1
    %s1595 = scalar_lea.sflag [#allocation15], 1
    %1596 = vsyncpa %s1595, 1

</llo_original>
